<compile_context>
chip_gen: v6e
topology: v6e:2x2x1
jax: 0.10.0
libtpu: 0.0.40
codegen_flags: <defaults>
</compile_context>

<pallas_src>
import functools
import math

import jax
import jax.numpy as jnp
from jax.experimental import pallas as pl
from jax.experimental.pallas import tpu as pltpu


# ---------------------------------------------------------------------------
# Hardware-aware defaults.
# ---------------------------------------------------------------------------
def _vmem_budget_bytes() -> int:
    """~80% of physical per-core VMEM (~51 MiB on v7x, ~102 MiB on v5e/v6e)."""
    try:
        cap = int(pltpu.get_tpu_info().vmem_capacity_bytes)
    except Exception:
        cap = 64 * 1024 * 1024          # conservative fallback
    return max(32 * 1024 * 1024, (cap * 4) // 5)


def _device_kind() -> str:
    try:
        return jax.devices()[0].device_kind.lower()
    except Exception:
        return ""


def _is_v5e() -> bool:
    k = _device_kind()
    return ("v5 lite" in k) or ("v5e" in k) or ("v5litepod" in k)


def _round_up(a: int, b: int) -> int:
    return (a + b - 1) // b * b


# ---------------------------------------------------------------------------
# Fused transformer block kernel.
# grid = (batch_blocks, d_ff_chunks); the d_ff axis accumulates into VMEM scratch.
# ---------------------------------------------------------------------------
def _block_kernel(
    x_ref, wq_ref, wk_ref, wv_ref, wo_ref, ln1_ref, ln2_ref, w1_ref, w2_ref,
    o_ref,
    acc_sc, h2_sc,
    *, num_heads: int, eps: float, bt: int, seq: int, d_model: int,
    q_blk: int, exp_bf16: bool,
):
    kff = pl.program_id(1)
    n_tok = bt * seq
    dk = d_model // num_heads
    n_q = seq // q_blk

    def rmsnorm(v, g):
        return v * jax.lax.rsqrt(jnp.mean(v * v, axis=-1, keepdims=True) + eps) * g

    # ---- sublayer 1 (attention) + FFN prologue: only on the first d_ff chunk ----
    @pl.when(kff == 0)
    def _attention():
        x = x_ref[...].astype(jnp.float32)                        # (bt, S, D)
        h = rmsnorm(x, ln1_ref[...].astype(jnp.float32))
        h = h.reshape(n_tok, d_model).astype(jnp.bfloat16)

        # Weights arrive pre-transposed (in-features first) and bf16; 1/sqrt(dk) is
        # already folded into Wq by the wrapper.
        q3 = jnp.dot(h, wq_ref[...], preferred_element_type=jnp.float32
                     ).reshape(bt, seq, d_model).astype(jnp.bfloat16)
        k3 = jnp.dot(h, wk_ref[...], preferred_element_type=jnp.float32
                     ).reshape(bt, seq, d_model).astype(jnp.bfloat16)
        v3 = jnp.dot(h, wv_ref[...], preferred_element_type=jnp.float32
                     ).reshape(bt, seq, d_model).astype(jnp.bfloat16)

        acc_sc[...] = x        # residual; attention output accumulates into it below

        # Causal q-block tiling: q-block qi only attends to keys [0, (qi+1)*q_blk),
        # so score/exp work above the diagonal is skipped entirely.
        for qi in range(n_q):
            q0 = qi * q_blk
            kv_len = q0 + q_blk
            m_rows = bt * q_blk
            row = jax.lax.broadcasted_iota(jnp.int32, (1, q_blk, kv_len), 1) + q0
            col = jax.lax.broadcasted_iota(jnp.int32, (1, q_blk, kv_len), 2)
            causal = col > row                     # True above diagonal -> masked

            out_rows = jnp.zeros((m_rows, d_model), jnp.float32)
            # TODO(synk): for very large num_heads switch this static unroll to a
            # lax.fori_loop; that needs dynamic lane-dim slicing of q/k/v (dk < 128)
            # which does not lower robustly, so the loop stays static here.
            for hd in range(num_heads):
                hsl = slice(hd * dk, (hd + 1) * dk)
                s = jnp.einsum("bqd,bkd->bqk",
                               q3[:, q0:q0 + q_blk, hsl], k3[:, :kv_len, hsl],
                               preferred_element_type=jnp.float32)
                s = jnp.where(causal, -jnp.inf, s)
                m = jnp.max(s, axis=-1, keepdims=True)
                if exp_bf16:
                    # v6e/v7x: bf16 EUP has ~2x exp throughput; p is bf16 anyway.
                    e = jnp.exp((s - m).astype(jnp.bfloat16))
                else:
                    e = jnp.exp(s - m)             # v5e: no bf16 EUP
                denom = jnp.sum(e, axis=-1, keepdims=True, dtype=jnp.float32)
                inv = pl.reciprocal(denom, approx=True).astype(e.dtype)
                p = (e * inv).astype(jnp.bfloat16)
                ctx = jnp.einsum("bqk,bkd->bqd", p, v3[:, :kv_len, hsl],
                                 preferred_element_type=jnp.float32)
                # Wo-accumulate: ctx_h @ Wo[hd*dk:(hd+1)*dk, :], summed over heads --
                # no per-head context scratch, no masked lane stores.
                out_rows = out_rows + jnp.dot(
                    ctx.reshape(m_rows, dk).astype(jnp.bfloat16),
                    wo_ref[pl.ds(hd * dk, dk), :],
                    preferred_element_type=jnp.float32)

            acc_sc[:, pl.ds(q0, q_blk), :] += out_rows.reshape(bt, q_blk, d_model)

        x_mid = acc_sc[...]                        # x + attn (drop1 == identity)
        h2_sc[...] = rmsnorm(x_mid, ln2_ref[...].astype(jnp.float32)).astype(jnp.bfloat16)

    # ---- sublayer 2 (FFN), one d_ff chunk per grid step along axis 1 ----
    h2 = h2_sc[...].reshape(n_tok, d_model)
    l0 = jnp.dot(h2, w1_ref[...], preferred_element_type=jnp.float32)
    # Exact erf GELU (matches the module); tanh-approx GELU would change numerics.
    l0 = l0 * 0.5 * (1.0 + jax.lax.erf(l0 * (1.0 / math.sqrt(2.0))))
    ffn = jnp.dot(l0.astype(jnp.bfloat16), w2_ref[...],
                  preferred_element_type=jnp.float32)
    acc_sc[...] += ffn.reshape(bt, seq, d_model)

    @pl.when(kff == pl.num_programs(1) - 1)
    def _writeback():
        o_ref[...] = acc_sc[...].astype(o_ref.dtype)


def transformer_block(
    x, layer_params, *, num_heads: int, eps: float = 1e-5,
    batch_block=None, ff_block=None, q_block=None,
    param_dtype=jnp.bfloat16, vmem_limit_bytes=None, exp_bf16=None,
):
    """One TransformerBlockAblation (pre-norm). x: (B, S, D); weights in PyTorch layout."""
    B, S, D = x.shape
    d_ff = layer_params["w1"].shape[0]
    assert D % num_heads == 0

    if vmem_limit_bytes is None:
        vmem_limit_bytes = _vmem_budget_bytes()
    v5e = _is_v5e()
    if exp_bf16 is None:
        exp_bf16 = not v5e                       # v5e has no bf16 EUP

    # --- batch tile: target >=512 tokens/step (>=256 on v5e) within the VMEM budget.
    divs = [d for d in range(1, B + 1) if B % d == 0]
    if batch_block is not None and B % batch_block == 0:
        bt = batch_block
    else:
        target_tok = 256 if v5e else 512
        bt = next((d for d in divs if d * S >= target_tok), divs[-1])
        x_bytes = jnp.dtype(x.dtype).itemsize
        while bt > 1:
            n_tok = bt * S
            est = n_tok * D * (4 + 2)            # acc_sc (f32) + h2_sc (bf16)
            est += 4 * n_tok * D * x_bytes       # x & out blocks, double-buffered
            est += 6 * n_tok * D                 # q/k/v bf16 live values
            if est <= int(vmem_limit_bytes * 0.4):
                break
            bt = max(d for d in divs if d < bt)

    # --- d_ff chunk: keep (D,f)+(f,D) bf16 tiles (double-buffered) under ~1/3 budget.
    valid_ff = (ff_block is not None and d_ff % ff_block == 0
                and (ff_block == d_ff or ff_block % 128 == 0))
    if not valid_ff:
        if d_ff % 128 == 0:
            cap = max(128, (vmem_limit_bytes // 3) // (8 * D) // 128 * 128)
            ff_block = next((f for f in range(min(d_ff, cap), 0, -128)
                             if d_ff % f == 0), d_ff)
        else:
            ff_block = d_ff
    n_ff = d_ff // ff_block

    # --- causal q-block size (must divide S).
    if q_block is None or S % q_block != 0:
        q_block = next((c for c in (512, 256, 128) if S % c == 0), S)

    scale = 1.0 / math.sqrt(D // num_heads)
    wq_t = (layer_params["wq"].T * scale).astype(param_dtype)   # scale folded into Wq
    wk_t = layer_params["wk"].T.astype(param_dtype)
    wv_t = layer_params["wv"].T.astype(param_dtype)
    wo_t = layer_params["wo"].T.astype(param_dtype)
    w1_t = layer_params["w1"].T.astype(param_dtype)             # (D, d_ff)
    w2_t = layer_params["w2"].T.astype(param_dtype)             # (d_ff, D)
    ln1 = layer_params["ln1"].reshape(1, D).astype(jnp.float32)
    ln2 = layer_params["ln2"].reshape(1, D).astype(jnp.float32)

    kernel = functools.partial(
        _block_kernel, num_heads=num_heads, eps=eps, bt=bt, seq=S, d_model=D,
        q_blk=q_block, exp_bf16=bool(exp_bf16))

    def const(shape):
        # Grid-invariant operand: single-buffered (no wasted duplicate weight copy).
        return pl.BlockSpec(shape, lambda b, k, _n=len(shape): (0,) * _n,
                            pipeline_mode=pl.Buffered(1))

    return pl.pallas_call(
        kernel,
        out_shape=jax.ShapeDtypeStruct((B, S, D), x.dtype),
        grid_spec=pltpu.PrefetchScalarGridSpec(
            num_scalar_prefetch=0,
            grid=(B // bt, n_ff),
            in_specs=[
                pl.BlockSpec((bt, S, D), lambda b, k: (b, 0, 0)),     # x
                const((D, D)),                                        # Wq^T * scale
                const((D, D)),                                        # Wk^T
                const((D, D)),                                        # Wv^T
                const((D, D)),                                        # Wo^T
                const((1, D)),                                        # ln1 weight
                const((1, D)),                                        # ln2 weight
                pl.BlockSpec((D, ff_block), lambda b, k: (0, k)),     # W1^T chunk
                pl.BlockSpec((ff_block, D), lambda b, k: (k, 0)),     # W2^T chunk
            ],
            out_specs=pl.BlockSpec((bt, S, D), lambda b, k: (b, 0, 0)),
            scratch_shapes=[
                pltpu.VMEM((bt, S, D), jnp.float32),   # residual + attn + FFN accumulator
                pltpu.VMEM((bt, S, D), jnp.bfloat16),  # RMSNorm(x_mid), reused per ff chunk
            ],
        ),
        compiler_params=pltpu.CompilerParams(
            dimension_semantics=("parallel", "arbitrary"),
            vmem_limit_bytes=int(vmem_limit_bytes),
        ),
    )(x, wq_t, wk_t, wv_t, wo_t, ln1, ln2, w1_t, w2_t)


# ---------------------------------------------------------------------------
# Final RMSNorm + lm_head kernel.
# grid = (token_tiles, vocab_tiles); the norm is computed once per token tile (j==0)
# into a bf16 VMEM scratch and reused for every vocab tile.
# ---------------------------------------------------------------------------
def _rmsnorm_lm_head_kernel(x_ref, lnf_ref, w_ref, o_ref, h_sc, *, eps: float):
    @pl.when(pl.program_id(1) == 0)
    def _norm():
        x = x_ref[...].astype(jnp.float32)
        g = lnf_ref[...].astype(jnp.float32)
        h = x * jax.lax.rsqrt(jnp.mean(x * x, axis=-1, keepdims=True) + eps) * g
        h_sc[...] = h.astype(jnp.bfloat16)

    o_ref[...] = jnp.dot(h_sc[...], w_ref[...],
                         preferred_element_type=jnp.float32).astype(o_ref.dtype)


def rmsnorm_lm_head(x, lnf_w, w_lm, *, eps: float = 1e-5, param_dtype=jnp.bfloat16,
                    tokens_per_tile: int = 512, vocab_tile: int = 1024,
                    vmem_limit_bytes=None, logits_dtype=jnp.float32):
    """logits = RMSNorm(x) @ w_lm.T.   x: (B, S, D), w_lm: (V, D) (PyTorch layout)."""
    B, S, D = x.shape
    V = w_lm.shape[0]
    N = B * S
    if vmem_limit_bytes is None:
        vmem_limit_bytes = _vmem_budget_bytes()

    # Tile sizes; non-divisible shapes are handled by zero padding (never tn=N / tv=V).
    tn = min(tokens_per_tile, _round_up(N, 8))
    Np = _round_up(N, tn)
    tv = min(vocab_tile, _round_up(V, 128)) if V >= 128 else V
    Vp = _round_up(V, tv)

    xf = x.reshape(N, D)
    if Np != N:
        xf = jnp.pad(xf, ((0, Np - N), (0, 0)))       # zero rows -> zero logits, sliced off
    w_t = w_lm.T.astype(param_dtype)                  # pre-transposed (D, V)
    if Vp != V:
        w_t = jnp.pad(w_t, ((0, 0), (0, Vp - V)))
    lnw = lnf_w.reshape(1, D).astype(jnp.float32)

    out = pl.pallas_call(
        functools.partial(_rmsnorm_lm_head_kernel, eps=eps),
        out_shape=jax.ShapeDtypeStruct((Np, Vp), logits_dtype),
        grid_spec=pltpu.PrefetchScalarGridSpec(
            num_scalar_prefetch=0,
            grid=(Np // tn, Vp // tv),
            in_specs=[
                pl.BlockSpec((tn, D), lambda i, j: (i, 0)),
                pl.BlockSpec((1, D), lambda i, j: (0, 0),
                             pipeline_mode=pl.Buffered(1)),
                pl.BlockSpec((D, tv), lambda i, j: (0, j)),
            ],
            out_specs=pl.BlockSpec((tn, tv), lambda i, j: (i, j)),
            scratch_shapes=[pltpu.VMEM((tn, D), jnp.bfloat16)],   # normed token tile
        ),
        compiler_params=pltpu.CompilerParams(
            dimension_semantics=("parallel", "arbitrary"),
            vmem_limit_bytes=int(vmem_limit_bytes),
        ),
    )(xf, lnw, w_t)
    if Np != N or Vp != V:
        out = out[:N, :V]
    return out.reshape(B, S, V)


# ---------------------------------------------------------------------------
# Full model forward (pre-norm, dropout == identity).
# ---------------------------------------------------------------------------
def transformer_lm(tokens, params, *, num_heads: int, eps: float = 1e-5,
                   ff_block=None, batch_block=None, q_block=None,
                   residual_dtype=jnp.bfloat16, logits_dtype=jnp.float32):
    B, T = tokens.shape
    # TODO(synk): token/position embedding gather is data-dependent; left to XLA's gather
    # (could be done with a scalar-prefetch DMA gather or one-hot matmul Pallas kernel).
    x = params["tok_emb"][tokens] + params["pos_emb"][:T][None, :, :]
    x = x.astype(residual_dtype)               # bf16 residual stream between layers
    for layer in params["layers"]:
        x = transformer_block(x, layer, num_heads=num_heads, eps=eps,
                              ff_block=ff_block, batch_block=batch_block,
                              q_block=q_block)
    return rmsnorm_lm_head(x, params["ln_final"], params["lm_head"], eps=eps,
                           logits_dtype=logits_dtype)


# ---------------------------------------------------------------------------
# Pure-JAX (f32) reference mirroring the PyTorch forward.
# ---------------------------------------------------------------------------
def _reference_lm(tokens, params, *, num_heads: int, eps: float = 1e-5):
    B, T = tokens.shape
    x = params["tok_emb"][tokens] + params["pos_emb"][:T][None, :, :]

    def rmsnorm(v, w):
        return v / jnp.sqrt(jnp.mean(v * v, axis=-1, keepdims=True) + eps) * w

    def attn(h, p):
        D = h.shape[-1]
        dk = D // num_heads
        q = (h @ p["wq"].T).reshape(B, T, num_heads, dk).transpose(0, 2, 1, 3)
        k = (h @ p["wk"].T).reshape(B, T, num_heads, dk).transpose(0, 2, 1, 3)
        v = (h @ p["wv"].T).reshape(B, T, num_heads, dk).transpose(0, 2, 1, 3)
        s = jnp.einsum("bhqd,bhkd->bhqk", q, k) / math.sqrt(dk)
        mask = jnp.triu(jnp.ones((T, T), bool), k=1)
        s = jnp.where(mask, -jnp.inf, s)
        w = jax.nn.softmax(s, axis=-1)
        c = jnp.einsum("bhqk,bhkd->bhqd", w, v)
        c = c.transpose(0, 2, 1, 3).reshape(B, T, D)
        return c @ p["wo"].T

    def ffn(h, p):
        l0 = h @ p["w1"].T
        l0 = l0 * 0.5 * (1.0 + jax.lax.erf(l0 / jnp.sqrt(2.0)))
        return l0 @ p["w2"].T

    for p in params["layers"]:
        x = x + attn(rmsnorm(x, p["ln1"]), p)
        x = x + ffn(rmsnorm(x, p["ln2"]), p)
    x = rmsnorm(x, params["ln_final"])
    return x @ params["lm_head"].T


if __name__ == "__main__":
    # Small config consistent with the module.
    vocab, context_len, n_layers = 64, 16, 2
    B, T, D, H, Dff = 2, 8, 32, 4, 256

    key = jax.random.PRNGKey(0)
    keys = iter(jax.random.split(key, 64))
    wscale = 0.05

    def linw(shape):
        return wscale * jax.random.normal(next(keys), shape, jnp.float32)

    layers = []
    for _ in range(n_layers):
        layers.append({
            "wq": linw((D, D)), "wk": linw((D, D)), "wv": linw((D, D)), "wo": linw((D, D)),
            "w1": linw((Dff, D)), "w2": linw((D, Dff)),
            "ln1": 1.0 + 0.1 * jax.random.normal(next(keys), (D,), jnp.float32),
            "ln2": 1.0 + 0.1 * jax.random.normal(next(keys), (D,), jnp.float32),
        })
    params = {
        "tok_emb": 0.1 * jax.random.normal(next(keys), (vocab, D), jnp.float32),
        "pos_emb": 0.1 * jax.random.normal(next(keys), (context_len, D), jnp.float32),
        "ln_final": 1.0 + 0.1 * jax.random.normal(next(keys), (D,), jnp.float32),
        "lm_head": linw((vocab, D)),
        "layers": layers,
    }
    tokens = jax.random.randint(next(keys), (B, T), 0, vocab, dtype=jnp.int32)

    # ff_block=128 exercises the multi-chunk d_ff accumulation path (Dff=256 -> 2 chunks);
    # batch_block / q_block are auto-derived (bt=2, q_blk=S here).
    lm = jax.jit(functools.partial(transformer_lm, num_heads=H, ff_block=128))
    logits = jax.block_until_ready(lm(tokens, params))

    ref = _reference_lm(tokens, params, num_heads=H)
    assert logits.shape == (B, T, vocab)
    err = float(jnp.max(jnp.abs(logits - ref)))
    assert err < 5e-2, f"mismatch vs JAX reference: max |err| = {err}"

    print("KERNEL_OK")
</pallas_src>

<mosaic_0001>
module attributes {stable_mosaic.version = 11 : i64} {
  func.func @_rmsnorm_lm_head_kernel(%arg0: i32, %arg1: i32, %arg2: memref<16x32xbf16, #tpu.memory_space<vmem>>, %arg3: memref<1x32xf32, #tpu.memory_space<vmem>>, %arg4: memref<32x64xbf16, #tpu.memory_space<vmem>>, %arg5: memref<16x64xf32, #tpu.memory_space<vmem>>, %arg6: memref<16x32xbf16, #tpu.memory_space<vmem>>) attributes {dimension_semantics = [#tpu.dimension_semantics<parallel>, #tpu.dimension_semantics<arbitrary>], iteration_bounds = array<i64: 1, 1>, scalar_prefetch = 0 : i64, scratch_operands = 1 : i64, tpu.core_type = #tpu.core_type<tc>, window_params = [{transform_indices = @transform_0, window_bounds = array<i64: 16, 32>}, {pipeline_mode = #tpu.pipeline_mode<synchronous>, transform_indices = @transform_1, window_bounds = array<i64: 1, 32>}, {transform_indices = @transform_2, window_bounds = array<i64: 32, 64>}, {transform_indices = @transform_3, window_bounds = array<i64: 16, 64>}]} {
    %c0_i32 = arith.constant 0 : i32
    %0 = arith.cmpi eq, %arg1, %c0_i32 : i32
    %1 = arith.extui %0 : i1 to i32
    %c0_i32_0 = arith.constant 0 : i32
    %2 = arith.cmpi ne, %1, %c0_i32_0 : i32
    scf.if %2 {
      %c0_6 = arith.constant 0 : index
      %c0_7 = arith.constant 0 : index
      %7 = vector.load %arg2[%c0_6, %c0_7] : memref<16x32xbf16, #tpu.memory_space<vmem>>, vector<16x32xbf16>
      %8 = arith.extf %7 : vector<16x32xbf16> to vector<16x32xf32>
      %c0_8 = arith.constant 0 : index
      %c0_9 = arith.constant 0 : index
      %9 = vector.load %arg3[%c0_8, %c0_9] : memref<1x32xf32, #tpu.memory_space<vmem>>, vector<1x32xf32>
      %10 = arith.mulf %8, %8 : vector<16x32xf32>
      %cst_10 = arith.constant dense<0.000000e+00> : vector<16xf32>
      %11 = vector.multi_reduction <add>, %10, %cst_10 [1] : vector<16x32xf32> to vector<16xf32>
      %12 = vector.shape_cast %11 : vector<16xf32> to vector<16x1xf32>
      %cst_11 = arith.constant 3.200000e+01 : f32
      %13 = vector.broadcast %cst_11 : f32 to vector<16x1xf32>
      %14 = arith.divf %12, %13 : vector<16x1xf32>
      %cst_12 = arith.constant 9.99999974E-6 : f32
      %15 = vector.broadcast %cst_12 : f32 to vector<16x1xf32>
      %16 = arith.addf %14, %15 : vector<16x1xf32>
      %17 = math.rsqrt %16 : vector<16x1xf32>
      %18 = vector.broadcast %17 : vector<16x1xf32> to vector<16x32xf32>
      %19 = arith.mulf %8, %18 : vector<16x32xf32>
      %20 = vector.broadcast %9 : vector<1x32xf32> to vector<16x32xf32>
      %21 = arith.mulf %19, %20 : vector<16x32xf32>
      %22 = arith.truncf %21 : vector<16x32xf32> to vector<16x32xbf16>
      %c0_13 = arith.constant 0 : index
      %c0_14 = arith.constant 0 : index
      %23 = vector.load %arg6[%c0_13, %c0_14] : memref<16x32xbf16, #tpu.memory_space<vmem>>, vector<16x32xbf16>
      tpu.vector_store %arg6[%c0_13, %c0_14], %22 {strides = array<i32>} : memref<16x32xbf16, #tpu.memory_space<vmem>>, vector<16x32xbf16>,
    } else {
    }
    %c0 = arith.constant 0 : index
    %c0_1 = arith.constant 0 : index
    %3 = vector.load %arg6[%c0, %c0_1] : memref<16x32xbf16, #tpu.memory_space<vmem>>, vector<16x32xbf16>
    %c0_2 = arith.constant 0 : index
    %c0_3 = arith.constant 0 : index
    %4 = vector.load %arg4[%c0_2, %c0_3] : memref<32x64xbf16, #tpu.memory_space<vmem>>, vector<32x64xbf16>
    %cst = arith.constant dense<0.000000e+00> : vector<16x64xf32>
    %5 = tpu.matmul %3, %4, %cst {dimension_numbers = #tpu.dot_dimension_numbers<[1], [0], [0], [1], [0, 0, 1, 1], [], []>} : vector<16x32xbf16>, vector<32x64xbf16>, vector<16x64xf32> -> vector<16x64xf32>
    %c0_4 = arith.constant 0 : index
    %c0_5 = arith.constant 0 : index
    %6 = vector.load %arg5[%c0_4, %c0_5] : memref<16x64xf32, #tpu.memory_space<vmem>>, vector<16x64xf32>
    tpu.vector_store %arg5[%c0_4, %c0_5], %5 {strides = array<i32>} : memref<16x64xf32, #tpu.memory_space<vmem>>, vector<16x64xf32>,
    return
  }
  func.func @transform_0(%arg0: i32, %arg1: i32) -> (i32, i32) {
    %c0_i32 = arith.constant 0 : i32
    %c0_i32_0 = arith.constant 0 : i32
    return %arg0, %c0_i32 : i32, i32
  }
  func.func @transform_1(%arg0: i32, %arg1: i32) -> (i32, i32) {
    %c0_i32 = arith.constant 0 : i32
    %c0_i32_0 = arith.constant 0 : i32
    %c0_i32_1 = arith.constant 0 : i32
    return %c0_i32, %c0_i32_0 : i32, i32
  }
  func.func @transform_2(%arg0: i32, %arg1: i32) -> (i32, i32) {
    %c0_i32 = arith.constant 0 : i32
    %c0_i32_0 = arith.constant 0 : i32
    return %c0_i32, %arg1 : i32, i32
  }
  func.func @transform_3(%arg0: i32, %arg1: i32) -> (i32, i32) {
    %c0_i32 = arith.constant 0 : i32
    return %arg0, %arg1 : i32, i32
  }
}

module attributes {stable_mosaic.version = 11 : i64} {
  func.func @_block_kernel(%arg0: i32, %arg1: i32, %arg2: memref<2x8x32xbf16, #tpu.memory_space<vmem>>, %arg3: memref<32x32xbf16, #tpu.memory_space<vmem>>, %arg4: memref<32x32xbf16, #tpu.memory_space<vmem>>, %arg5: memref<32x32xbf16, #tpu.memory_space<vmem>>, %arg6: memref<32x32xbf16, #tpu.memory_space<vmem>>, %arg7: memref<1x32xf32, #tpu.memory_space<vmem>>, %arg8: memref<1x32xf32, #tpu.memory_space<vmem>>, %arg9: memref<32x128xbf16, #tpu.memory_space<vmem>>, %arg10: memref<128x32xbf16, #tpu.memory_space<vmem>>, %arg11: memref<2x8x32xbf16, #tpu.memory_space<vmem>>, %arg12: memref<2x8x32xf32, #tpu.memory_space<vmem>>, %arg13: memref<2x8x32xbf16, #tpu.memory_space<vmem>>) attributes {dimension_semantics = [#tpu.dimension_semantics<parallel>, #tpu.dimension_semantics<arbitrary>], iteration_bounds = array<i64: 1, 2>, scalar_prefetch = 0 : i64, scratch_operands = 2 : i64, tpu.core_type = #tpu.core_type<tc>, window_params = [{transform_indices = @transform_0, window_bounds = array<i64: 2, 8, 32>}, {pipeline_mode = #tpu.pipeline_mode<synchronous>, transform_indices = @transform_1, window_bounds = array<i64: 32, 32>}, {pipeline_mode = #tpu.pipeline_mode<synchronous>, transform_indices = @transform_2, window_bounds = array<i64: 32, 32>}, {pipeline_mode = #tpu.pipeline_mode<synchronous>, transform_indices = @transform_3, window_bounds = array<i64: 32, 32>}, {pipeline_mode = #tpu.pipeline_mode<synchronous>, transform_indices = @transform_4, window_bounds = array<i64: 32, 32>}, {pipeline_mode = #tpu.pipeline_mode<synchronous>, transform_indices = @transform_5, window_bounds = array<i64: 1, 32>}, {pipeline_mode = #tpu.pipeline_mode<synchronous>, transform_indices = @transform_6, window_bounds = array<i64: 1, 32>}, {transform_indices = @transform_7, window_bounds = array<i64: 32, 128>}, {transform_indices = @transform_8, window_bounds = array<i64: 128, 32>}, {transform_indices = @transform_9, window_bounds = array<i64: 2, 8, 32>}]} {
    %c0_i32 = arith.constant 0 : i32
    %0 = arith.cmpi eq, %arg1, %c0_i32 : i32
    %1 = arith.extui %0 : i1 to i32
    %c0_i32_0 = arith.constant 0 : i32
    %2 = arith.cmpi ne, %1, %c0_i32_0 : i32
    scf.if %2 {
      %c0_18 = arith.constant 0 : index
      %c0_19 = arith.constant 0 : index
      %c0_20 = arith.constant 0 : index
      %25 = vector.load %arg2[%c0_18, %c0_19, %c0_20] : memref<2x8x32xbf16, #tpu.memory_space<vmem>>, vector<2x8x32xbf16>
      %26 = arith.extf %25 : vector<2x8x32xbf16> to vector<2x8x32xf32>
      %c0_21 = arith.constant 0 : index
      %c0_22 = arith.constant 0 : index
      %27 = vector.load %arg7[%c0_21, %c0_22] : memref<1x32xf32, #tpu.memory_space<vmem>>, vector<1x32xf32>
      %28 = arith.mulf %26, %26 : vector<2x8x32xf32>
      %cst_23 = arith.constant dense<0.000000e+00> : vector<2x8xf32>
      %29 = vector.multi_reduction <add>, %28, %cst_23 [2] : vector<2x8x32xf32> to vector<2x8xf32>
      %30 = vector.shape_cast %29 : vector<2x8xf32> to vector<2x8x1xf32>
      %cst_24 = arith.constant 3.200000e+01 : f32
      %31 = vector.broadcast %cst_24 : f32 to vector<2x8x1xf32>
      %32 = arith.divf %30, %31 : vector<2x8x1xf32>
      %cst_25 = arith.constant 9.99999974E-6 : f32
      %33 = vector.broadcast %cst_25 : f32 to vector<2x8x1xf32>
      %34 = arith.addf %32, %33 : vector<2x8x1xf32>
      %35 = math.rsqrt %34 : vector<2x8x1xf32>
      %36 = vector.broadcast %35 : vector<2x8x1xf32> to vector<2x8x32xf32>
      %37 = arith.mulf %26, %36 : vector<2x8x32xf32>
      %38 = vector.shape_cast %27 : vector<1x32xf32> to vector<1x1x32xf32>
      %39 = vector.broadcast %38 : vector<1x1x32xf32> to vector<2x8x32xf32>
      %40 = arith.mulf %37, %39 : vector<2x8x32xf32>
      %41 = vector.shape_cast %40 : vector<2x8x32xf32> to vector<16x32xf32>
      %42 = arith.truncf %41 : vector<16x32xf32> to vector<16x32xbf16>
      %c0_26 = arith.constant 0 : index
      %c0_27 = arith.constant 0 : index
      %43 = vector.load %arg3[%c0_26, %c0_27] : memref<32x32xbf16, #tpu.memory_space<vmem>>, vector<32x32xbf16>
      %cst_28 = arith.constant dense<0.000000e+00> : vector<16x32xf32>
      %44 = tpu.matmul %42, %43, %cst_28 {dimension_numbers = #tpu.dot_dimension_numbers<[1], [0], [0], [1], [0, 0, 1, 1], [], []>} : vector<16x32xbf16>, vector<32x32xbf16>, vector<16x32xf32> -> vector<16x32xf32>
      %45 = vector.shape_cast %44 : vector<16x32xf32> to vector<2x8x32xf32>
      %46 = arith.truncf %45 : vector<2x8x32xf32> to vector<2x8x32xbf16>
      %c0_29 = arith.constant 0 : index
      %c0_30 = arith.constant 0 : index
      %47 = vector.load %arg4[%c0_29, %c0_30] : memref<32x32xbf16, #tpu.memory_space<vmem>>, vector<32x32xbf16>
      %cst_31 = arith.constant dense<0.000000e+00> : vector<16x32xf32>
      %48 = tpu.matmul %42, %47, %cst_31 {dimension_numbers = #tpu.dot_dimension_numbers<[1], [0], [0], [1], [0, 0, 1, 1], [], []>} : vector<16x32xbf16>, vector<32x32xbf16>, vector<16x32xf32> -> vector<16x32xf32>
      %49 = vector.shape_cast %48 : vector<16x32xf32> to vector<2x8x32xf32>
      %50 = arith.truncf %49 : vector<2x8x32xf32> to vector<2x8x32xbf16>
      %c0_32 = arith.constant 0 : index
      %c0_33 = arith.constant 0 : index
      %51 = vector.load %arg5[%c0_32, %c0_33] : memref<32x32xbf16, #tpu.memory_space<vmem>>, vector<32x32xbf16>
      %cst_34 = arith.constant dense<0.000000e+00> : vector<16x32xf32>
      %52 = tpu.matmul %42, %51, %cst_34 {dimension_numbers = #tpu.dot_dimension_numbers<[1], [0], [0], [1], [0, 0, 1, 1], [], []>} : vector<16x32xbf16>, vector<32x32xbf16>, vector<16x32xf32> -> vector<16x32xf32>
      %53 = vector.shape_cast %52 : vector<16x32xf32> to vector<2x8x32xf32>
      %54 = arith.truncf %53 : vector<2x8x32xf32> to vector<2x8x32xbf16>
      %c0_35 = arith.constant 0 : index
      %c0_36 = arith.constant 0 : index
      %c0_37 = arith.constant 0 : index
      %55 = vector.load %arg12[%c0_35, %c0_36, %c0_37] : memref<2x8x32xf32, #tpu.memory_space<vmem>>, vector<2x8x32xf32>
      tpu.vector_store %arg12[%c0_35, %c0_36, %c0_37], %26 {strides = array<i32>} : memref<2x8x32xf32, #tpu.memory_space<vmem>>, vector<2x8x32xf32>,
      %56 = tpu.iota {dimensions = array<i32: 1>} : vector<1x8x8xi32>
      %c0_i32_38 = arith.constant 0 : i32
      %57 = vector.broadcast %c0_i32_38 : i32 to vector<1x8x8xi32>
      %58 = arith.addi %56, %57 : vector<1x8x8xi32>
      %59 = tpu.iota {dimensions = array<i32: 2>} : vector<1x8x8xi32>
      %60 = arith.cmpi sgt, %59, %58 : vector<1x8x8xi32>
      %cst_39 = arith.constant 0.000000e+00 : f32
      %61 = vector.broadcast %cst_39 : f32 to vector<16x32xf32>
      %62 = vector.extract_strided_slice %46 {offsets = [0, 0, 0], sizes = [2, 8, 8], strides = [1, 1, 1]} : vector<2x8x32xbf16> to vector<2x8x8xbf16>
      %63 = vector.extract_strided_slice %50 {offsets = [0, 0, 0], sizes = [2, 8, 8], strides = [1, 1, 1]} : vector<2x8x32xbf16> to vector<2x8x8xbf16>
      "tpu.trace_start"() <{level = 10 : i32, message = "bqd,bkd->bqk"}> : () -> ()
      %cst_40 = arith.constant dense<0.000000e+00> : vector<2x8x8xf32>
      %64 = tpu.matmul %62, %63, %cst_40 {dimension_numbers = #tpu.dot_dimension_numbers<[2], [2], [1], [1], [0, 0, 0, 1, 1, 1], [0], [0]>} : vector<2x8x8xbf16>, vector<2x8x8xbf16>, vector<2x8x8xf32> -> vector<2x8x8xf32>
      %cst_41 = arith.constant 0xFF800000 : f32
      "tpu.trace_stop"() : () -> ()
      %65 = vector.shape_cast %60 : vector<1x8x8xi1> to vector<1x8x8xi1>
      %66 = vector.broadcast %65 : vector<1x8x8xi1> to vector<2x8x8xi1>
      %67 = vector.broadcast %cst_41 : f32 to vector<2x8x8xf32>
      %68 = arith.select %66, %67, %64 : vector<2x8x8xi1>, vector<2x8x8xf32>
      %cst_42 = arith.constant dense<0xFF800000> : vector<2x8xf32>
      %69 = vector.multi_reduction <maximumf>, %68, %cst_42 [2] : vector<2x8x8xf32> to vector<2x8xf32>
      %70 = vector.shape_cast %69 : vector<2x8xf32> to vector<2x8x1xf32>
      %71 = vector.broadcast %70 : vector<2x8x1xf32> to vector<2x8x8xf32>
      %72 = arith.subf %68, %71 : vector<2x8x8xf32>
      %73 = arith.truncf %72 : vector<2x8x8xf32> to vector<2x8x8xbf16>
      %74 = math.exp %73 : vector<2x8x8xbf16>
      %75 = arith.extf %74 : vector<2x8x8xbf16> to vector<2x8x8xf32>
      %cst_43 = arith.constant dense<0.000000e+00> : vector<2x8xf32>
      %76 = vector.multi_reduction <add>, %75, %cst_43 [2] : vector<2x8x8xf32> to vector<2x8xf32>
      %77 = vector.shape_cast %76 : vector<2x8xf32> to vector<2x8x1xf32>
      %78 = tpu.reciprocal %77 {approx = true} : vector<2x8x1xf32> -> vector<2x8x1xf32>
      %79 = arith.truncf %78 : vector<2x8x1xf32> to vector<2x8x1xbf16>
      %80 = vector.broadcast %79 : vector<2x8x1xbf16> to vector<2x8x8xbf16>
      %81 = arith.mulf %74, %80 : vector<2x8x8xbf16>
      %82 = vector.extract_strided_slice %54 {offsets = [0, 0, 0], sizes = [2, 8, 8], strides = [1, 1, 1]} : vector<2x8x32xbf16> to vector<2x8x8xbf16>
      "tpu.trace_start"() <{level = 10 : i32, message = "bqk,bkd->bqd"}> : () -> ()
      %cst_44 = arith.constant dense<0.000000e+00> : vector<2x8x8xf32>
      %83 = tpu.matmul %81, %82, %cst_44 {dimension_numbers = #tpu.dot_dimension_numbers<[2], [1], [1], [2], [0, 0, 0, 1, 1, 2], [0], [0]>} : vector<2x8x8xbf16>, vector<2x8x8xbf16>, vector<2x8x8xf32> -> vector<2x8x8xf32>
      "tpu.trace_stop"() : () -> ()
      %84 = vector.shape_cast %83 : vector<2x8x8xf32> to vector<16x8xf32>
      %85 = arith.truncf %84 : vector<16x8xf32> to vector<16x8xbf16>
      %c0_45 = arith.constant 0 : index
      %c0_46 = arith.constant 0 : index
      %86 = vector.load %arg6[%c0_45, %c0_46] : memref<32x32xbf16, #tpu.memory_space<vmem>>, vector<8x32xbf16>
      %cst_47 = arith.constant dense<0.000000e+00> : vector<16x32xf32>
      %87 = tpu.matmul %85, %86, %cst_47 {dimension_numbers = #tpu.dot_dimension_numbers<[1], [0], [0], [1], [0, 0, 1, 1], [], []>} : vector<16x8xbf16>, vector<8x32xbf16>, vector<16x32xf32> -> vector<16x32xf32>
      %88 = arith.addf %61, %87 : vector<16x32xf32>
      %89 = vector.extract_strided_slice %46 {offsets = [0, 0, 8], sizes = [2, 8, 8], strides = [1, 1, 1]} : vector<2x8x32xbf16> to vector<2x8x8xbf16>
      %90 = vector.extract_strided_slice %50 {offsets = [0, 0, 8], sizes = [2, 8, 8], strides = [1, 1, 1]} : vector<2x8x32xbf16> to vector<2x8x8xbf16>
      "tpu.trace_start"() <{level = 10 : i32, message = "bqd,bkd->bqk"}> : () -> ()
      %cst_48 = arith.constant dense<0.000000e+00> : vector<2x8x8xf32>
      %91 = tpu.matmul %89, %90, %cst_48 {dimension_numbers = #tpu.dot_dimension_numbers<[2], [2], [1], [1], [0, 0, 0, 1, 1, 1], [0], [0]>} : vector<2x8x8xbf16>, vector<2x8x8xbf16>, vector<2x8x8xf32> -> vector<2x8x8xf32>
      %cst_49 = arith.constant 0xFF800000 : f32
      "tpu.trace_stop"() : () -> ()
      %92 = vector.shape_cast %60 : vector<1x8x8xi1> to vector<1x8x8xi1>
      %93 = vector.broadcast %92 : vector<1x8x8xi1> to vector<2x8x8xi1>
      %94 = vector.broadcast %cst_49 : f32 to vector<2x8x8xf32>
      %95 = arith.select %93, %94, %91 : vector<2x8x8xi1>, vector<2x8x8xf32>
      %cst_50 = arith.constant dense<0xFF800000> : vector<2x8xf32>
      %96 = vector.multi_reduction <maximumf>, %95, %cst_50 [2] : vector<2x8x8xf32> to vector<2x8xf32>
      %97 = vector.shape_cast %96 : vector<2x8xf32> to vector<2x8x1xf32>
      %98 = vector.broadcast %97 : vector<2x8x1xf32> to vector<2x8x8xf32>
      %99 = arith.subf %95, %98 : vector<2x8x8xf32>
      %100 = arith.truncf %99 : vector<2x8x8xf32> to vector<2x8x8xbf16>
      %101 = math.exp %100 : vector<2x8x8xbf16>
      %102 = arith.extf %101 : vector<2x8x8xbf16> to vector<2x8x8xf32>
      %cst_51 = arith.constant dense<0.000000e+00> : vector<2x8xf32>
      %103 = vector.multi_reduction <add>, %102, %cst_51 [2] : vector<2x8x8xf32> to vector<2x8xf32>
      %104 = vector.shape_cast %103 : vector<2x8xf32> to vector<2x8x1xf32>
      %105 = tpu.reciprocal %104 {approx = true} : vector<2x8x1xf32> -> vector<2x8x1xf32>
      %106 = arith.truncf %105 : vector<2x8x1xf32> to vector<2x8x1xbf16>
      %107 = vector.broadcast %106 : vector<2x8x1xbf16> to vector<2x8x8xbf16>
      %108 = arith.mulf %101, %107 : vector<2x8x8xbf16>
      %109 = vector.extract_strided_slice %54 {offsets = [0, 0, 8], sizes = [2, 8, 8], strides = [1, 1, 1]} : vector<2x8x32xbf16> to vector<2x8x8xbf16>
      "tpu.trace_start"() <{level = 10 : i32, message = "bqk,bkd->bqd"}> : () -> ()
      %cst_52 = arith.constant dense<0.000000e+00> : vector<2x8x8xf32>
      %110 = tpu.matmul %108, %109, %cst_52 {dimension_numbers = #tpu.dot_dimension_numbers<[2], [1], [1], [2], [0, 0, 0, 1, 1, 2], [0], [0]>} : vector<2x8x8xbf16>, vector<2x8x8xbf16>, vector<2x8x8xf32> -> vector<2x8x8xf32>
      "tpu.trace_stop"() : () -> ()
      %111 = vector.shape_cast %110 : vector<2x8x8xf32> to vector<16x8xf32>
      %112 = arith.truncf %111 : vector<16x8xf32> to vector<16x8xbf16>
      %c8 = arith.constant 8 : index
      %c0_53 = arith.constant 0 : index
      %113 = vector.load %arg6[%c8, %c0_53] : memref<32x32xbf16, #tpu.memory_space<vmem>>, vector<8x32xbf16>
      %cst_54 = arith.constant dense<0.000000e+00> : vector<16x32xf32>
      %114 = tpu.matmul %112, %113, %cst_54 {dimension_numbers = #tpu.dot_dimension_numbers<[1], [0], [0], [1], [0, 0, 1, 1], [], []>} : vector<16x8xbf16>, vector<8x32xbf16>, vector<16x32xf32> -> vector<16x32xf32>
      %115 = arith.addf %88, %114 : vector<16x32xf32>
      %116 = vector.extract_strided_slice %46 {offsets = [0, 0, 16], sizes = [2, 8, 8], strides = [1, 1, 1]} : vector<2x8x32xbf16> to vector<2x8x8xbf16>
      %117 = vector.extract_strided_slice %50 {offsets = [0, 0, 16], sizes = [2, 8, 8], strides = [1, 1, 1]} : vector<2x8x32xbf16> to vector<2x8x8xbf16>
      "tpu.trace_start"() <{level = 10 : i32, message = "bqd,bkd->bqk"}> : () -> ()
      %cst_55 = arith.constant dense<0.000000e+00> : vector<2x8x8xf32>
      %118 = tpu.matmul %116, %117, %cst_55 {dimension_numbers = #tpu.dot_dimension_numbers<[2], [2], [1], [1], [0, 0, 0, 1, 1, 1], [0], [0]>} : vector<2x8x8xbf16>, vector<2x8x8xbf16>, vector<2x8x8xf32> -> vector<2x8x8xf32>
      %cst_56 = arith.constant 0xFF800000 : f32
      "tpu.trace_stop"() : () -> ()
      %119 = vector.shape_cast %60 : vector<1x8x8xi1> to vector<1x8x8xi1>
      %120 = vector.broadcast %119 : vector<1x8x8xi1> to vector<2x8x8xi1>
      %121 = vector.broadcast %cst_56 : f32 to vector<2x8x8xf32>
      %122 = arith.select %120, %121, %118 : vector<2x8x8xi1>, vector<2x8x8xf32>
      %cst_57 = arith.constant dense<0xFF800000> : vector<2x8xf32>
      %123 = vector.multi_reduction <maximumf>, %122, %cst_57 [2] : vector<2x8x8xf32> to vector<2x8xf32>
      %124 = vector.shape_cast %123 : vector<2x8xf32> to vector<2x8x1xf32>
      %125 = vector.broadcast %124 : vector<2x8x1xf32> to vector<2x8x8xf32>
      %126 = arith.subf %122, %125 : vector<2x8x8xf32>
      %127 = arith.truncf %126 : vector<2x8x8xf32> to vector<2x8x8xbf16>
      %128 = math.exp %127 : vector<2x8x8xbf16>
      %129 = arith.extf %128 : vector<2x8x8xbf16> to vector<2x8x8xf32>
      %cst_58 = arith.constant dense<0.000000e+00> : vector<2x8xf32>
      %130 = vector.multi_reduction <add>, %129, %cst_58 [2] : vector<2x8x8xf32> to vector<2x8xf32>
      %131 = vector.shape_cast %130 : vector<2x8xf32> to vector<2x8x1xf32>
      %132 = tpu.reciprocal %131 {approx = true} : vector<2x8x1xf32> -> vector<2x8x1xf32>
      %133 = arith.truncf %132 : vector<2x8x1xf32> to vector<2x8x1xbf16>
      %134 = vector.broadcast %133 : vector<2x8x1xbf16> to vector<2x8x8xbf16>
      %135 = arith.mulf %128, %134 : vector<2x8x8xbf16>
      %136 = vector.extract_strided_slice %54 {offsets = [0, 0, 16], sizes = [2, 8, 8], strides = [1, 1, 1]} : vector<2x8x32xbf16> to vector<2x8x8xbf16>
      "tpu.trace_start"() <{level = 10 : i32, message = "bqk,bkd->bqd"}> : () -> ()
      %cst_59 = arith.constant dense<0.000000e+00> : vector<2x8x8xf32>
      %137 = tpu.matmul %135, %136, %cst_59 {dimension_numbers = #tpu.dot_dimension_numbers<[2], [1], [1], [2], [0, 0, 0, 1, 1, 2], [0], [0]>} : vector<2x8x8xbf16>, vector<2x8x8xbf16>, vector<2x8x8xf32> -> vector<2x8x8xf32>
      "tpu.trace_stop"() : () -> ()
      %138 = vector.shape_cast %137 : vector<2x8x8xf32> to vector<16x8xf32>
      %139 = arith.truncf %138 : vector<16x8xf32> to vector<16x8xbf16>
      %c16 = arith.constant 16 : index
      %c0_60 = arith.constant 0 : index
      %140 = vector.load %arg6[%c16, %c0_60] : memref<32x32xbf16, #tpu.memory_space<vmem>>, vector<8x32xbf16>
      %cst_61 = arith.constant dense<0.000000e+00> : vector<16x32xf32>
      %141 = tpu.matmul %139, %140, %cst_61 {dimension_numbers = #tpu.dot_dimension_numbers<[1], [0], [0], [1], [0, 0, 1, 1], [], []>} : vector<16x8xbf16>, vector<8x32xbf16>, vector<16x32xf32> -> vector<16x32xf32>
      %142 = arith.addf %115, %141 : vector<16x32xf32>
      %143 = vector.extract_strided_slice %46 {offsets = [0, 0, 24], sizes = [2, 8, 8], strides = [1, 1, 1]} : vector<2x8x32xbf16> to vector<2x8x8xbf16>
      %144 = vector.extract_strided_slice %50 {offsets = [0, 0, 24], sizes = [2, 8, 8], strides = [1, 1, 1]} : vector<2x8x32xbf16> to vector<2x8x8xbf16>
      "tpu.trace_start"() <{level = 10 : i32, message = "bqd,bkd->bqk"}> : () -> ()
      %cst_62 = arith.constant dense<0.000000e+00> : vector<2x8x8xf32>
      %145 = tpu.matmul %143, %144, %cst_62 {dimension_numbers = #tpu.dot_dimension_numbers<[2], [2], [1], [1], [0, 0, 0, 1, 1, 1], [0], [0]>} : vector<2x8x8xbf16>, vector<2x8x8xbf16>, vector<2x8x8xf32> -> vector<2x8x8xf32>
      %cst_63 = arith.constant 0xFF800000 : f32
      "tpu.trace_stop"() : () -> ()
      %146 = vector.shape_cast %60 : vector<1x8x8xi1> to vector<1x8x8xi1>
      %147 = vector.broadcast %146 : vector<1x8x8xi1> to vector<2x8x8xi1>
      %148 = vector.broadcast %cst_63 : f32 to vector<2x8x8xf32>
      %149 = arith.select %147, %148, %145 : vector<2x8x8xi1>, vector<2x8x8xf32>
      %cst_64 = arith.constant dense<0xFF800000> : vector<2x8xf32>
      %150 = vector.multi_reduction <maximumf>, %149, %cst_64 [2] : vector<2x8x8xf32> to vector<2x8xf32>
      %151 = vector.shape_cast %150 : vector<2x8xf32> to vector<2x8x1xf32>
      %152 = vector.broadcast %151 : vector<2x8x1xf32> to vector<2x8x8xf32>
      %153 = arith.subf %149, %152 : vector<2x8x8xf32>
      %154 = arith.truncf %153 : vector<2x8x8xf32> to vector<2x8x8xbf16>
      %155 = math.exp %154 : vector<2x8x8xbf16>
      %156 = arith.extf %155 : vector<2x8x8xbf16> to vector<2x8x8xf32>
      %cst_65 = arith.constant dense<0.000000e+00> : vector<2x8xf32>
      %157 = vector.multi_reduction <add>, %156, %cst_65 [2] : vector<2x8x8xf32> to vector<2x8xf32>
      %158 = vector.shape_cast %157 : vector<2x8xf32> to vector<2x8x1xf32>
      %159 = tpu.reciprocal %158 {approx = true} : vector<2x8x1xf32> -> vector<2x8x1xf32>
      %160 = arith.truncf %159 : vector<2x8x1xf32> to vector<2x8x1xbf16>
      %161 = vector.broadcast %160 : vector<2x8x1xbf16> to vector<2x8x8xbf16>
      %162 = arith.mulf %155, %161 : vector<2x8x8xbf16>
      %163 = vector.extract_strided_slice %54 {offsets = [0, 0, 24], sizes = [2, 8, 8], strides = [1, 1, 1]} : vector<2x8x32xbf16> to vector<2x8x8xbf16>
      "tpu.trace_start"() <{level = 10 : i32, message = "bqk,bkd->bqd"}> : () -> ()
      %cst_66 = arith.constant dense<0.000000e+00> : vector<2x8x8xf32>
      %164 = tpu.matmul %162, %163, %cst_66 {dimension_numbers = #tpu.dot_dimension_numbers<[2], [1], [1], [2], [0, 0, 0, 1, 1, 2], [0], [0]>} : vector<2x8x8xbf16>, vector<2x8x8xbf16>, vector<2x8x8xf32> -> vector<2x8x8xf32>
      "tpu.trace_stop"() : () -> ()
      %165 = vector.shape_cast %164 : vector<2x8x8xf32> to vector<16x8xf32>
      %166 = arith.truncf %165 : vector<16x8xf32> to vector<16x8xbf16>
      %c24 = arith.constant 24 : index
      %c0_67 = arith.constant 0 : index
      %167 = vector.load %arg6[%c24, %c0_67] : memref<32x32xbf16, #tpu.memory_space<vmem>>, vector<8x32xbf16>
      %cst_68 = arith.constant dense<0.000000e+00> : vector<16x32xf32>
      %168 = tpu.matmul %166, %167, %cst_68 {dimension_numbers = #tpu.dot_dimension_numbers<[1], [0], [0], [1], [0, 0, 1, 1], [], []>} : vector<16x8xbf16>, vector<8x32xbf16>, vector<16x32xf32> -> vector<16x32xf32>
      %169 = arith.addf %142, %168 : vector<16x32xf32>
      %c0_69 = arith.constant 0 : index
      %c0_70 = arith.constant 0 : index
      %c0_71 = arith.constant 0 : index
      %170 = vector.load %arg12[%c0_69, %c0_70, %c0_71] : memref<2x8x32xf32, #tpu.memory_space<vmem>>, vector<2x8x32xf32>
      %171 = vector.shape_cast %169 : vector<16x32xf32> to vector<2x8x32xf32>
      %172 = arith.addf %170, %171 : vector<2x8x32xf32>
      %c0_72 = arith.constant 0 : index
      %c0_73 = arith.constant 0 : index
      %c0_74 = arith.constant 0 : index
      %173 = vector.load %arg12[%c0_72, %c0_73, %c0_74] : memref<2x8x32xf32, #tpu.memory_space<vmem>>, vector<2x8x32xf32>
      tpu.vector_store %arg12[%c0_72, %c0_73, %c0_74], %172 {strides = array<i32>} : memref<2x8x32xf32, #tpu.memory_space<vmem>>, vector<2x8x32xf32>,
      %c0_75 = arith.constant 0 : index
      %c0_76 = arith.constant 0 : index
      %c0_77 = arith.constant 0 : index
      %174 = vector.load %arg12[%c0_75, %c0_76, %c0_77] : memref<2x8x32xf32, #tpu.memory_space<vmem>>, vector<2x8x32xf32>
      %c0_78 = arith.constant 0 : index
      %c0_79 = arith.constant 0 : index
      %175 = vector.load %arg8[%c0_78, %c0_79] : memref<1x32xf32, #tpu.memory_space<vmem>>, vector<1x32xf32>
      %176 = arith.mulf %174, %174 : vector<2x8x32xf32>
      %cst_80 = arith.constant dense<0.000000e+00> : vector<2x8xf32>
      %177 = vector.multi_reduction <add>, %176, %cst_80 [2] : vector<2x8x32xf32> to vector<2x8xf32>
      %178 = vector.shape_cast %177 : vector<2x8xf32> to vector<2x8x1xf32>
      %cst_81 = arith.constant 3.200000e+01 : f32
      %179 = vector.broadcast %cst_81 : f32 to vector<2x8x1xf32>
      %180 = arith.divf %178, %179 : vector<2x8x1xf32>
      %cst_82 = arith.constant 9.99999974E-6 : f32
      %181 = vector.broadcast %cst_82 : f32 to vector<2x8x1xf32>
      %182 = arith.addf %180, %181 : vector<2x8x1xf32>
      %183 = math.rsqrt %182 : vector<2x8x1xf32>
      %184 = vector.broadcast %183 : vector<2x8x1xf32> to vector<2x8x32xf32>
      %185 = arith.mulf %174, %184 : vector<2x8x32xf32>
      %186 = vector.shape_cast %175 : vector<1x32xf32> to vector<1x1x32xf32>
      %187 = vector.broadcast %186 : vector<1x1x32xf32> to vector<2x8x32xf32>
      %188 = arith.mulf %185, %187 : vector<2x8x32xf32>
      %189 = arith.truncf %188 : vector<2x8x32xf32> to vector<2x8x32xbf16>
      %c0_83 = arith.constant 0 : index
      %c0_84 = arith.constant 0 : index
      %c0_85 = arith.constant 0 : index
      %190 = vector.load %arg13[%c0_83, %c0_84, %c0_85] : memref<2x8x32xbf16, #tpu.memory_space<vmem>>, vector<2x8x32xbf16>
      tpu.vector_store %arg13[%c0_83, %c0_84, %c0_85], %189 {strides = array<i32>} : memref<2x8x32xbf16, #tpu.memory_space<vmem>>, vector<2x8x32xbf16>,
    } else {
    }
    %c0 = arith.constant 0 : index
    %c0_1 = arith.constant 0 : index
    %c0_2 = arith.constant 0 : index
    %3 = vector.load %arg13[%c0, %c0_1, %c0_2] : memref<2x8x32xbf16, #tpu.memory_space<vmem>>, vector<2x8x32xbf16>
    %4 = vector.shape_cast %3 : vector<2x8x32xbf16> to vector<16x32xbf16>
    %c0_3 = arith.constant 0 : index
    %c0_4 = arith.constant 0 : index
    %5 = vector.load %arg9[%c0_3, %c0_4] : memref<32x128xbf16, #tpu.memory_space<vmem>>, vector<32x128xbf16>
    %cst = arith.constant dense<0.000000e+00> : vector<16x128xf32>
    %6 = tpu.matmul %4, %5, %cst {dimension_numbers = #tpu.dot_dimension_numbers<[1], [0], [0], [1], [0, 0, 1, 1], [], []>} : vector<16x32xbf16>, vector<32x128xbf16>, vector<16x128xf32> -> vector<16x128xf32>
    %cst_5 = arith.constant 5.000000e-01 : f32
    %7 = vector.broadcast %cst_5 : f32 to vector<16x128xf32>
    %8 = arith.mulf %6, %7 : vector<16x128xf32>
    %cst_6 = arith.constant 0.707106769 : f32
    %9 = vector.broadcast %cst_6 : f32 to vector<16x128xf32>
    %10 = arith.mulf %6, %9 : vector<16x128xf32>
    %11 = math.erf %10 : vector<16x128xf32>
    %cst_7 = arith.constant 1.000000e+00 : f32
    %12 = vector.broadcast %cst_7 : f32 to vector<16x128xf32>
    %13 = arith.addf %12, %11 : vector<16x128xf32>
    %14 = arith.mulf %8, %13 : vector<16x128xf32>
    %15 = arith.truncf %14 : vector<16x128xf32> to vector<16x128xbf16>
    %c0_8 = arith.constant 0 : index
    %c0_9 = arith.constant 0 : index
    %16 = vector.load %arg10[%c0_8, %c0_9] : memref<128x32xbf16, #tpu.memory_space<vmem>>, vector<128x32xbf16>
    %cst_10 = arith.constant dense<0.000000e+00> : vector<16x32xf32>
    %17 = tpu.matmul %15, %16, %cst_10 {dimension_numbers = #tpu.dot_dimension_numbers<[1], [0], [0], [1], [0, 0, 1, 1], [], []>} : vector<16x128xbf16>, vector<128x32xbf16>, vector<16x32xf32> -> vector<16x32xf32>
    %c0_11 = arith.constant 0 : index
    %c0_12 = arith.constant 0 : index
    %c0_13 = arith.constant 0 : index
    %18 = vector.load %arg12[%c0_11, %c0_12, %c0_13] : memref<2x8x32xf32, #tpu.memory_space<vmem>>, vector<2x8x32xf32>
    %19 = vector.shape_cast %17 : vector<16x32xf32> to vector<2x8x32xf32>
    %20 = arith.addf %18, %19 : vector<2x8x32xf32>
    %c0_14 = arith.constant 0 : index
    %c0_15 = arith.constant 0 : index
    %c0_16 = arith.constant 0 : index
    %21 = vector.load %arg12[%c0_14, %c0_15, %c0_16] : memref<2x8x32xf32, #tpu.memory_space<vmem>>, vector<2x8x32xf32>
    tpu.vector_store %arg12[%c0_14, %c0_15, %c0_16], %20 {strides = array<i32>} : memref<2x8x32xf32, #tpu.memory_space<vmem>>, vector<2x8x32xf32>,
    %c1_i32 = arith.constant 1 : i32
    %22 = arith.cmpi eq, %arg1, %c1_i32 : i32
    %23 = arith.extui %22 : i1 to i32
    %c0_i32_17 = arith.constant 0 : i32
    %24 = arith.cmpi ne, %23, %c0_i32_17 : i32
    scf.if %24 {
      %c0_18 = arith.constant 0 : index
      %c0_19 = arith.constant 0 : index
      %c0_20 = arith.constant 0 : index
      %25 = vector.load %arg12[%c0_18, %c0_19, %c0_20] : memref<2x8x32xf32, #tpu.memory_space<vmem>>, vector<2x8x32xf32>
      %26 = arith.truncf %25 : vector<2x8x32xf32> to vector<2x8x32xbf16>
      %c0_21 = arith.constant 0 : index
      %c0_22 = arith.constant 0 : index
      %c0_23 = arith.constant 0 : index
      %27 = vector.load %arg11[%c0_21, %c0_22, %c0_23] : memref<2x8x32xbf16, #tpu.memory_space<vmem>>, vector<2x8x32xbf16>
      tpu.vector_store %arg11[%c0_21, %c0_22, %c0_23], %26 {strides = array<i32>} : memref<2x8x32xbf16, #tpu.memory_space<vmem>>, vector<2x8x32xbf16>,
    } else {
    }
    return
  }
  func.func @transform_0(%arg0: i32, %arg1: i32) -> (i32, i32, i32) {
    %c0_i32 = arith.constant 0 : i32
    %c0_i32_0 = arith.constant 0 : i32
    %c0_i32_1 = arith.constant 0 : i32
    return %arg0, %c0_i32, %c0_i32_0 : i32, i32, i32
  }
  func.func @transform_1(%arg0: i32, %arg1: i32) -> (i32, i32) {
    %c0_i32 = arith.constant 0 : i32
    %c0_i32_0 = arith.constant 0 : i32
    %c0_i32_1 = arith.constant 0 : i32
    return %c0_i32, %c0_i32_0 : i32, i32
  }
  func.func @transform_2(%arg0: i32, %arg1: i32) -> (i32, i32) {
    %c0_i32 = arith.constant 0 : i32
    %c0_i32_0 = arith.constant 0 : i32
    %c0_i32_1 = arith.constant 0 : i32
    return %c0_i32, %c0_i32_0 : i32, i32
  }
  func.func @transform_3(%arg0: i32, %arg1: i32) -> (i32, i32) {
    %c0_i32 = arith.constant 0 : i32
    %c0_i32_0 = arith.constant 0 : i32
    %c0_i32_1 = arith.constant 0 : i32
    return %c0_i32, %c0_i32_0 : i32, i32
  }
  func.func @transform_4(%arg0: i32, %arg1: i32) -> (i32, i32) {
    %c0_i32 = arith.constant 0 : i32
    %c0_i32_0 = arith.constant 0 : i32
    %c0_i32_1 = arith.constant 0 : i32
    return %c0_i32, %c0_i32_0 : i32, i32
  }
  func.func @transform_5(%arg0: i32, %arg1: i32) -> (i32, i32) {
    %c0_i32 = arith.constant 0 : i32
    %c0_i32_0 = arith.constant 0 : i32
    %c0_i32_1 = arith.constant 0 : i32
    return %c0_i32, %c0_i32_0 : i32, i32
  }
  func.func @transform_6(%arg0: i32, %arg1: i32) -> (i32, i32) {
    %c0_i32 = arith.constant 0 : i32
    %c0_i32_0 = arith.constant 0 : i32
    %c0_i32_1 = arith.constant 0 : i32
    return %c0_i32, %c0_i32_0 : i32, i32
  }
  func.func @transform_7(%arg0: i32, %arg1: i32) -> (i32, i32) {
    %c0_i32 = arith.constant 0 : i32
    %c0_i32_0 = arith.constant 0 : i32
    return %c0_i32, %arg1 : i32, i32
  }
  func.func @transform_8(%arg0: i32, %arg1: i32) -> (i32, i32) {
    %c0_i32 = arith.constant 0 : i32
    %c0_i32_0 = arith.constant 0 : i32
    return %arg1, %c0_i32 : i32, i32
  }
  func.func @transform_9(%arg0: i32, %arg1: i32) -> (i32, i32, i32) {
    %c0_i32 = arith.constant 0 : i32
    %c0_i32_0 = arith.constant 0 : i32
    %c0_i32_1 = arith.constant 0 : i32
    return %arg0, %c0_i32, %c0_i32_0 : i32, i32, i32
  }
}

</mosaic_0001>

<llo_original>
// kernel: transformer_lm.5
$region0: #{transformer_lm.5}
  #allocation0 [shape = 'u32[]', space=smem, size = 0x4, offset = 0x4, fixed_abs, tag = 'smem constant byte address 0x4 - core index']
  #allocation1 [shape = 'u32[144,128]{1,0:T(1,128)}', space=vmem, size = 0x12000, scoped, tag = 'internal scratch']
  #allocation2 [shape = 'bf16[16,32]{1,0:T(8,128)(2,1)}', space=vmem, size = 0x1000, scoped, tag = 'scratch operand']
  %s0 = inlined_call_operand.vmem [shape: bf16[16,32], index: 0, kind: input, shape index: {}]
  %s1 = inlined_call_operand.vmem [shape: f32[1,32], index: 1, kind: input, shape index: {}]
  %s2 = inlined_call_operand.vmem [shape: bf16[32,64], index: 2, kind: input, shape index: {}]
  %s3 = inlined_call_operand.hbm [shape: f32[16,64], index: 3, kind: output, shape index: {}]
  %s4 = sld [smem:[#allocation0]]
  $region26: #{transformer_lm.5} parent=0
    _
  %s6 = ssub.s32 1, %s4
  %s7 = scalar_select 0, %s6, %s4
  $region1: #{transformer_lm.5} parent=0
    #allocation3 [shape = 'u8[8192]{0}', space=vmem, size = 0x2000, scoped, tag = 'output window, operand 0, single buffered']
    #allocation4 [shape = 's32[1]{0}', space=sflag, size = 0x4, scoped, tag = 'scoped memory for transformer_lm.5']
    %8 = vsyncpa [#allocation4], 0
    // Predicated region
    $region2: #{transformer_lm.5} parent=1 // pred_check
      _
    $region3: #{transformer_lm.5} parent=1 // pred_check_branch
      %10 = sbr.rel (0) target = $region5
    $region4: #{transformer_lm.5} parent=1 // pred_region
      _
    $region5: #{transformer_lm.5} parent=1 // pred_fallthru
      _
    // Predicated region
    $region6: #{transformer_lm.5} parent=1 // pred_check
      _
    $region7: #{transformer_lm.5} parent=1 // pred_check_branch
      %12 = sbr.rel (0) target = $region9
    $region8: #{transformer_lm.5} parent=1 // pred_region
      _
    $region9: #{transformer_lm.5} parent=1 // pred_fallthru
      _
    // Predicated region
    $region10: #{transformer_lm.5} parent=1 // pred_check
      _
    $region11: #{transformer_lm.5} parent=1 // pred_check_branch
      %14 = sbr.rel (0) target = $region13
    $region12: #{transformer_lm.5} parent=1 // pred_region
      _
    $region13: #{transformer_lm.5} parent=1 // pred_fallthru
      _
    %p16 = scmp.eq.s32.totalorder 0, 0
    // Predicated region
    $region14: #{transformer_lm.5} parent=1 // pred_check
      %p17 = pneg %p16
    $region15: #{transformer_lm.5} parent=1 // pred_check_branch
      %19 = sbr.rel (%p17) target = $region17
    $region16: #{transformer_lm.5} parent=1 // pred_region
      %v20 = vld [vmem:[%s0] sm:$0xf]
      %v21 = vld [vmem:[%s0 + $0x4] sm:$0xf]
      %v22 = vunpack.c.l.bf16 %v20
      %v23 = vunpack.c.l.bf16 %v21
      %v24 = vld [vmem:[%s1] sm:$0x1]
      %v25 = vmul.f32 %v22, %v22
      %v26 = vmul.f32 %v23, %v23
      %vm27 = vcmask 261120
      %v28 = vsel %vm27, %v25, 0.0
      %29 = vadd.xlane.f32.xlu0 %v28
      %v30 = vpop.xlane.xlu0 %29
      %v31 = vsel %vm27, %v26, 0.0
      %32 = vadd.xlane.f32.xlu0 %v31
      %v33 = vpop.xlane.xlu0 %32
      %v34 = vrcp.pop 32.0
      %v35 = vmul.f32 %v30, %v34
      %v36 = vmul.f32 %v33, %v34
      %v37 = vadd.f32 %v35, 1e-05
      %v38 = vadd.f32 %v36, 1e-05
      %v39 = vrsqrt.pop %v37
      %v40 = vrsqrt.pop %v38
      %v41 = vmul.f32 %v22, %v39
      %v42 = vmul.f32 %v23, %v40
      %v44 = vlaneseq
      %v45 = vshrl.u32 %v44, 7
      %v46 = vsub.s32 0, %v45
      %v47 = vrot.slane %v24, %v46
      %v49 = vmul.f32 %v41, %v47
      %v50 = vmul.f32 %v42, %v47
      %v51 = vpack.c.bf16 %v50, %v49
      %v53 = vunpack.c.l.b16 %v51
      %v54 = vunpack.c.h.b16 %v51
      %v55 = vpack.c.b16 %v53, %v53
      %v56 = vpack.c.b16 %v54, %v54
      %vm59 = vcmask 257024
      %60 = vst.msk [vmem:[#allocation2] sm:$0xf] %vm59, %v55
      %61 = vst.msk [vmem:[#allocation2 + $0x4] sm:$0xf] %vm59, %v56
    $region17: #{transformer_lm.5} parent=1 // pred_fallthru
      _
    %v62 = vld [vmem:[#allocation2] sm:$0xf]
    %v63 = vld [vmem:[#allocation2 + $0x4] sm:$0xf]
    %v64 = vld [vmem:[%s2] sm:$0xf]
    %v65 = vld [vmem:[%s2 + $0x4] sm:$0xf]
    %v66 = vld [vmem:[%s2 + $0x8] sm:$0xf]
    %v67 = vld [vmem:[%s2 + $0xc] sm:$0xf]
    %v70 = vunpack.c.l.b16 %v62
    %v71 = vunpack.c.l.b16 %v63
    %v72 = vpack.c.b16 %v71, %v70
    %v77 = vunpack.c.l.b16 %v64
    %v78 = vunpack.c.l.b16 %v65
    %v79 = vunpack.c.l.b16 %v66
    %v80 = vunpack.c.l.b16 %v67
    %v81 = vpack.c.b16 %v78, %v77
    %v82 = vpack.c.b16 %v80, %v79
    %vm85 = vcmask 261120
    %v87 = vsel %vm85, %v72, 0
    %89 = vmatprep.subr.bf16.mxu0 0
    %90 = vmatpush1.bf16.msra.mxu0 0
    %91 = vmatprep.subr.bf16.mxu0 0
    %92 = vmatpush1.bf16.msra.mxu0 0
    %93 = vmatprep.subr.bf16.mxu0 0
    %94 = vmatpush1.bf16.msra.mxu0 0
    %95 = vmatprep.subr.bf16.mxu0 0
    %96 = vmatpush1.bf16.msra.mxu0 0
    %97 = vmatprep.subr.bf16.mxu0 0
    %98 = vmatpush1.bf16.msra.mxu0 0
    %99 = vmatprep.subr.bf16.mxu0 0
    %100 = vmatpush1.bf16.msra.mxu0 0
    %101 = vmatprep.subr.bf16.mxu0 0
    %102 = vmatpush1.bf16.msra.mxu0 %v82
    %103 = vmatprep.subr.bf16.mxu0 0
    %104 = vmatpush1.bf16.msra.mxu0 %v81
    %105 = vmatprep.subr.bf16.mxu0 0
    %106 = vmatpush2.bf16.msra.mxu0 0
    %107 = vmatprep.subr.bf16.mxu0 0
    %108 = vmatpush2.bf16.msra.mxu0 0
    %109 = vmatprep.subr.bf16.mxu0 0
    %110 = vmatpush2.bf16.msra.mxu0 0
    %111 = vmatprep.subr.bf16.mxu0 0
    %112 = vmatpush2.bf16.msra.mxu0 0
    %113 = vmatprep.subr.bf16.mxu0 0
    %114 = vmatpush2.bf16.msra.mxu0 0
    %115 = vmatprep.subr.bf16.mxu0 0
    %116 = vmatpush2.bf16.msra.mxu0 0
    %117 = vmatprep.subr.bf16.mxu0 0
    %118 = vmatpush2.bf16.msra.mxu0 0
    %119 = vmatprep.subr.bf16.mxu0 0
    %120 = vmatpush2.bf16.msra.mxu0 0
    %121 = vmatprep.mubr.bf16.mxu0 0
    %122 = vmatmul.mubr.bf16.gmra.mxu0 %v87
    %v123 = vpop.f32.mrf.mxu0
    %v124 = vadd.f32 0.0, %v123
    %v125 = vpop.f32.mrf.mxu0
    %v126 = vpop.f32.mrf.mxu0
    %v127 = vadd.f32 0.0, %v126
    %v128 = vpop.f32.mrf.mxu0
    %129 = vdwg.mxu0
    %vm130 = vcmask 523264
    %131 = vst.msk [vmem:[#allocation3] sm:$0xff] %vm130, %v124
    %132 = vst.msk [vmem:[#allocation3 + $0x8] sm:$0xff] %vm130, %v127
    // Predicated region
    $region18: #{transformer_lm.5} parent=1 // pred_check
      _
    $region19: #{transformer_lm.5} parent=1 // pred_check_branch
      %134 = sbr.rel (0) target = $region21
    $region20: #{transformer_lm.5} parent=1 // pred_region
      %s136 = ssub.s32 256, 256
      %137 = vsyncadd [#allocation4], %s136
      %s138 = sshll.u32 [#allocation3], 4
      %s139 = int_to_ptr.vmem [resolvable:$true] %s138
      %144 = dma.vmem_to_hbm [thread:$0]  %s139, 256, %s3, [#allocation4], 128, 128, 8
    $region21: #{transformer_lm.5} parent=1 // pred_fallthru
      _
    // Predicated region
    $region22: #{transformer_lm.5} parent=1 // pred_check
      _
    $region23: #{transformer_lm.5} parent=1 // pred_check_branch
      %146 = sbr.rel (0) target = $region25
    $region24: #{transformer_lm.5} parent=1 // pred_region
      %147 = dma.done [#allocation4], 256
    $region25: #{transformer_lm.5} parent=1 // pred_fallthru
      _
    %148 = vsyncpa [#allocation4], 1

// kernel: transformer_lm.3
$region0: #{transformer_lm.3}
  #allocation0 [shape = 'u32[]', space=smem, size = 0x4, offset = 0x4, fixed_abs, tag = 'smem constant byte address 0x4 - core index']
  #allocation1 [shape = 'u32[144,128]{1,0:T(1,128)}', space=vmem, size = 0x12000, scoped, tag = 'internal scratch']
  #allocation2 [shape = 'f32[2,8,32]{2,1,0:T(8,128)}', space=vmem, size = 0x2000, scoped, tag = 'scratch operand']
  #allocation3 [shape = 'bf16[2,8,32]{2,1,0:T(8,128)(2,1)}', space=vmem, size = 0x1000, scoped, tag = 'scratch operand']
  %s0 = inlined_call_operand.vmem [shape: bf16[2,8,32], index: 0, kind: input, shape index: {}]
  %s1 = inlined_call_operand.vmem [shape: bf16[32,32], index: 1, kind: input, shape index: {}]
  %s2 = inlined_call_operand.vmem [shape: bf16[32,32], index: 2, kind: input, shape index: {}]
  %s3 = inlined_call_operand.vmem [shape: bf16[32,32], index: 3, kind: input, shape index: {}]
  %s4 = inlined_call_operand.vmem [shape: bf16[32,32], index: 4, kind: input, shape index: {}]
  %s5 = inlined_call_operand.vmem [shape: f32[1,32], index: 5, kind: input, shape index: {}]
  %s6 = inlined_call_operand.vmem [shape: f32[1,32], index: 6, kind: input, shape index: {}]
  %s7 = inlined_call_operand.vmem [shape: bf16[32,256], index: 7, kind: input, shape index: {}]
  %s8 = inlined_call_operand.vmem [shape: bf16[256,32], index: 8, kind: input, shape index: {}]
  %s9 = inlined_call_operand.vmem [shape: bf16[2,8,32], index: 9, kind: output, shape index: {}]
  %s10 = sld [smem:[#allocation0]]
  $region118: #{transformer_lm.3} parent=0
    _
  %s12 = ssub.s32 1, %s10
  %s13 = scalar_select 0, %s12, %s10
  $region1: #{transformer_lm.3} parent=0
    #allocation4 [shape = 'u8[16384]{0}', space=vmem, size = 0x4000, scoped, tag = 'input window, operand 7']
    loop: start=0, step=1, limit=4
    $region2: #{transformer_lm.3} parent=1 // loop_pre_header
      _
    $region3: #{transformer_lm.3} parent=1 // loop_header
      %s15 = sphi 0, %s19
      %p16 = scmp.ge.s32.totalorder %s15, 4
      %s22 = sphi 0, %s34
      %s23 = sphi 0, %s30
      %s24 = sphi 0, %s22
      %s25 = sphi 0, %s23
      %s26 = sphi 0, %s24
      %s27 = sphi 0, %s25
      %s37 = sphi 0, %s39
      %s40 = sphi 0, %s37
      %s41 = sphi 0, %s40
      %s57 = sphi 0, %s41
      %s61 = sphi 0, %s61
      %s63 = sphi 0, %s61
      %s64 = sphi 0, %s63
      %s78 = sphi 0, %s64
      %s82 = sphi 0, %s82
      %s84 = sphi 0, %s82
      %s85 = sphi 0, %s84
      %s99 = sphi 0, %s85
      %s103 = sphi 0, %s103
      %s105 = sphi 0, %s103
      %s106 = sphi 0, %s105
      %s120 = sphi 0, %s106
      %s124 = sphi 0, %s124
      %s126 = sphi 0, %s124
      %s127 = sphi 0, %s126
      %s141 = sphi 0, %s127
      %s145 = sphi 0, %s145
      %s147 = sphi 0, %s145
      %s148 = sphi 0, %s147
      %s162 = sphi 0, %s148
      %s166 = sphi 0, %s166
      %s168 = sphi 0, %s166
      %s169 = sphi 0, %s168
      %s183 = sphi 0, %s169
      %s189 = sphi 0, %s191
      %s192 = sphi 0, %s189
      %s193 = sphi 0, %s192
      %s209 = sphi 0, %s193
      %s215 = sphi 0, %s217
      %s218 = sphi 0, %s215
      %s219 = sphi 0, %s218
      %s235 = sphi 0, %s219
      %s241 = sphi 0, %s243
      %s244 = sphi 0, %s241
      %s245 = sphi 0, %s244
      %s261 = sphi 0, %s245
    $region4: #{transformer_lm.3} parent=1 // loop_header_branch
      %18 = sbr.rel (%p16) target = $region8
    $region5: #{transformer_lm.3} parent=1 // loop_body
      %s20 = ssub.s32 %s15, 1
      %s21 = ssub.s32 %s15, 2
      %s28 = sadd.s32 1, %s23
      %p29 = scmp.ge.s32.totalorder %s28, 2
      %s30 = scalar_select %p29, 0, %s28
      %s31 = sadd.s32 1, %s22
      %s32 = scalar_select %p29, %s31, %s22
      %p33 = scmp.ge.s32.totalorder %s32, 1
      %s34 = scalar_select %p33, 0, %s32
      %s35 = ssub.s32 %s22, %s34
      %p36 = scmp.eq.s32.totalorder %s35, 0
      %s38 = sadd.s32 %s37, 1
      %s39 = scalar_select %p36, %s37, %s38
      %p42 = pneg %p36
      %p43 = scmp.eq.s32.totalorder %s15, 1
      %p44 = por %p42, %p43
      %p45 = scmp.ne.s32.totalorder %s37, %s40
      %p46 = scmp.eq.s32.totalorder %s15, 0
      %p47 = por %p45, %p46
      %p48 = scmp.ne.s32.totalorder %s37, %s40
      %p49 = scmp.eq.s32.totalorder %s20, 1
      %p50 = por %p48, %p49
      %p51 = scmp.ne.s32.totalorder %s40, %s41
      %p52 = scmp.eq.s32.totalorder %s20, 0
      %p53 = por %p51, %p52
      %p54 = scmp.ne.s32.totalorder %s40, %s41
      %p55 = scmp.eq.s32.totalorder %s21, 1
      %p56 = por %p54, %p55
      %p58 = scmp.ne.s32.totalorder %s41, %s57
      %p59 = scmp.eq.s32.totalorder %s21, 0
      %p60 = por %p58, %p59
      %s62 = sadd.s32 %s61, 1
      %p65 = scmp.eq.s32.totalorder %s15, 1
      %p66 = scmp.ne.s32.totalorder %s61, %s63
      %p67 = scmp.eq.s32.totalorder %s15, 0
      %p68 = por %p66, %p67
      %p69 = scmp.ne.s32.totalorder %s61, %s63
      %p70 = scmp.eq.s32.totalorder %s20, 1
      %p71 = por %p69, %p70
      %p72 = scmp.ne.s32.totalorder %s63, %s64
      %p73 = scmp.eq.s32.totalorder %s20, 0
      %p74 = por %p72, %p73
      %p75 = scmp.ne.s32.totalorder %s63, %s64
      %p76 = scmp.eq.s32.totalorder %s21, 1
      %p77 = por %p75, %p76
      %p79 = scmp.ne.s32.totalorder %s64, %s78
      %p80 = scmp.eq.s32.totalorder %s21, 0
      %p81 = por %p79, %p80
      %s83 = sadd.s32 %s82, 1
      %p86 = scmp.eq.s32.totalorder %s15, 1
      %p87 = scmp.ne.s32.totalorder %s82, %s84
      %p88 = scmp.eq.s32.totalorder %s15, 0
      %p89 = por %p87, %p88
      %p90 = scmp.ne.s32.totalorder %s82, %s84
      %p91 = scmp.eq.s32.totalorder %s20, 1
      %p92 = por %p90, %p91
      %p93 = scmp.ne.s32.totalorder %s84, %s85
      %p94 = scmp.eq.s32.totalorder %s20, 0
      %p95 = por %p93, %p94
      %p96 = scmp.ne.s32.totalorder %s84, %s85
      %p97 = scmp.eq.s32.totalorder %s21, 1
      %p98 = por %p96, %p97
      %p100 = scmp.ne.s32.totalorder %s85, %s99
      %p101 = scmp.eq.s32.totalorder %s21, 0
      %p102 = por %p100, %p101
      %s104 = sadd.s32 %s103, 1
      %p107 = scmp.eq.s32.totalorder %s15, 1
      %p108 = scmp.ne.s32.totalorder %s103, %s105
      %p109 = scmp.eq.s32.totalorder %s15, 0
      %p110 = por %p108, %p109
      %p111 = scmp.ne.s32.totalorder %s103, %s105
      %p112 = scmp.eq.s32.totalorder %s20, 1
      %p113 = por %p111, %p112
      %p114 = scmp.ne.s32.totalorder %s105, %s106
      %p115 = scmp.eq.s32.totalorder %s20, 0
      %p116 = por %p114, %p115
      %p117 = scmp.ne.s32.totalorder %s105, %s106
      %p118 = scmp.eq.s32.totalorder %s21, 1
      %p119 = por %p117, %p118
      %p121 = scmp.ne.s32.totalorder %s106, %s120
      %p122 = scmp.eq.s32.totalorder %s21, 0
      %p123 = por %p121, %p122
      %s125 = sadd.s32 %s124, 1
      %p128 = scmp.eq.s32.totalorder %s15, 1
      %p129 = scmp.ne.s32.totalorder %s124, %s126
      %p130 = scmp.eq.s32.totalorder %s15, 0
      %p131 = por %p129, %p130
      %p132 = scmp.ne.s32.totalorder %s124, %s126
      %p133 = scmp.eq.s32.totalorder %s20, 1
      %p134 = por %p132, %p133
      %p135 = scmp.ne.s32.totalorder %s126, %s127
      %p136 = scmp.eq.s32.totalorder %s20, 0
      %p137 = por %p135, %p136
      %p138 = scmp.ne.s32.totalorder %s126, %s127
      %p139 = scmp.eq.s32.totalorder %s21, 1
      %p140 = por %p138, %p139
      %p142 = scmp.ne.s32.totalorder %s127, %s141
      %p143 = scmp.eq.s32.totalorder %s21, 0
      %p144 = por %p142, %p143
      %s146 = sadd.s32 %s145, 1
      %p149 = scmp.eq.s32.totalorder %s15, 1
      %p150 = scmp.ne.s32.totalorder %s145, %s147
      %p151 = scmp.eq.s32.totalorder %s15, 0
      %p152 = por %p150, %p151
      %p153 = scmp.ne.s32.totalorder %s145, %s147
      %p154 = scmp.eq.s32.totalorder %s20, 1
      %p155 = por %p153, %p154
      %p156 = scmp.ne.s32.totalorder %s147, %s148
      %p157 = scmp.eq.s32.totalorder %s20, 0
      %p158 = por %p156, %p157
      %p159 = scmp.ne.s32.totalorder %s147, %s148
      %p160 = scmp.eq.s32.totalorder %s21, 1
      %p161 = por %p159, %p160
      %p163 = scmp.ne.s32.totalorder %s148, %s162
      %p164 = scmp.eq.s32.totalorder %s21, 0
      %p165 = por %p163, %p164
      %s167 = sadd.s32 %s166, 1
      %p170 = scmp.eq.s32.totalorder %s15, 1
      %p171 = scmp.ne.s32.totalorder %s166, %s168
      %p172 = scmp.eq.s32.totalorder %s15, 0
      %p173 = por %p171, %p172
      %p174 = scmp.ne.s32.totalorder %s166, %s168
      %p175 = scmp.eq.s32.totalorder %s20, 1
      %p176 = por %p174, %p175
      %p177 = scmp.ne.s32.totalorder %s168, %s169
      %p178 = scmp.eq.s32.totalorder %s20, 0
      %p179 = por %p177, %p178
      %p180 = scmp.ne.s32.totalorder %s168, %s169
      %p181 = scmp.eq.s32.totalorder %s21, 1
      %p182 = por %p180, %p181
      %p184 = scmp.ne.s32.totalorder %s169, %s183
      %p185 = scmp.eq.s32.totalorder %s21, 0
      %p186 = por %p184, %p185
      %s187 = ssub.s32 %s23, %s30
      %p188 = scmp.eq.s32.totalorder %s187, 0
      %s190 = sadd.s32 %s189, 1
      %s191 = scalar_select %p188, %s189, %s190
      %p194 = pneg %p188
      %p195 = scmp.eq.s32.totalorder %s15, 1
      %p196 = por %p194, %p195
      %p197 = scmp.ne.s32.totalorder %s189, %s192
      %p198 = scmp.eq.s32.totalorder %s15, 0
      %p199 = por %p197, %p198
      %p200 = scmp.ne.s32.totalorder %s189, %s192
      %p201 = scmp.eq.s32.totalorder %s20, 1
      %p202 = por %p200, %p201
      %p203 = scmp.ne.s32.totalorder %s192, %s193
      %p204 = scmp.eq.s32.totalorder %s20, 0
      %p205 = por %p203, %p204
      %p206 = scmp.ne.s32.totalorder %s192, %s193
      %p207 = scmp.eq.s32.totalorder %s21, 1
      %p208 = por %p206, %p207
      %p210 = scmp.ne.s32.totalorder %s193, %s209
      %p211 = scmp.eq.s32.totalorder %s21, 0
      %p212 = por %p210, %p211
      %s213 = ssub.s32 %s23, %s30
      %p214 = scmp.eq.s32.totalorder %s213, 0
      %s216 = sadd.s32 %s215, 1
      %s217 = scalar_select %p214, %s215, %s216
      %p220 = pneg %p214
      %p221 = scmp.eq.s32.totalorder %s15, 1
      %p222 = por %p220, %p221
      %p223 = scmp.ne.s32.totalorder %s215, %s218
      %p224 = scmp.eq.s32.totalorder %s15, 0
      %p225 = por %p223, %p224
      %p226 = scmp.ne.s32.totalorder %s215, %s218
      %p227 = scmp.eq.s32.totalorder %s20, 1
      %p228 = por %p226, %p227
      %p229 = scmp.ne.s32.totalorder %s218, %s219
      %p230 = scmp.eq.s32.totalorder %s20, 0
      %p231 = por %p229, %p230
      %p232 = scmp.ne.s32.totalorder %s218, %s219
      %p233 = scmp.eq.s32.totalorder %s21, 1
      %p234 = por %p232, %p233
      %p236 = scmp.ne.s32.totalorder %s219, %s235
      %p237 = scmp.eq.s32.totalorder %s21, 0
      %p238 = por %p236, %p237
      %s239 = ssub.s32 %s22, %s34
      %p240 = scmp.eq.s32.totalorder %s239, 0
      %s242 = sadd.s32 %s241, 1
      %s243 = scalar_select %p240, %s241, %s242
      %p246 = pneg %p240
      %p247 = scmp.eq.s32.totalorder %s15, 1
      %p248 = por %p246, %p247
      %p249 = scmp.ne.s32.totalorder %s241, %s244
      %p250 = scmp.eq.s32.totalorder %s15, 0
      %p251 = por %p249, %p250
      %p252 = scmp.ne.s32.totalorder %s241, %s244
      %p253 = scmp.eq.s32.totalorder %s20, 1
      %p254 = por %p252, %p253
      %p255 = scmp.ne.s32.totalorder %s244, %s245
      %p256 = scmp.eq.s32.totalorder %s20, 0
      %p257 = por %p255, %p256
      %p258 = scmp.ne.s32.totalorder %s244, %s245
      %p259 = scmp.eq.s32.totalorder %s21, 1
      %p260 = por %p258, %p259
      %p262 = scmp.ne.s32.totalorder %s245, %s261
      %p263 = scmp.eq.s32.totalorder %s21, 0
      %p264 = por %p262, %p263
      %p265 = scmp.le.s32.totalorder 1, %s15
      %p266 = scmp.lt.s32.totalorder %s15, 3
      %p267 = pnand %p265, %p266
      %p268 = pneg %p267
      // Predicated region
      $region9: #{transformer_lm.3} parent=5 // pred_check
        _
      $region10: #{transformer_lm.3} parent=5 // pred_check_branch
        %270 = sbr.rel (%p267) target = $region12
      $region11: #{transformer_lm.3} parent=5 // pred_region
        %s271 = ssub.s32 %s15, 1
        // Predicated region
        $region13: #{transformer_lm.3} parent=11 // pred_check
          %p272 = pneg %p53
        $region14: #{transformer_lm.3} parent=11 // pred_check_branch
          %274 = sbr.rel (%p272) target = $region16
        $region15: #{transformer_lm.3} parent=11 // pred_region
          %s275 = smul.u32 2, %s24
          %p276 = scmp.lt.s32.totalorder %s275, 1
          %s277 = scalar_select %p276, %s275, 1
          %s278 = smul.addr %s277, 4
          %s279 = scalar_lea.vmem %s0, %s278
          %s280 = smul.u32 2, %s24
        $region16: #{transformer_lm.3} parent=11 // pred_fallthru
          _
        // Predicated region
        $region17: #{transformer_lm.3} parent=11 // pred_check
          %p281 = pneg %p74
        $region18: #{transformer_lm.3} parent=11 // pred_check_branch
          %283 = sbr.rel (%p281) target = $region20
        $region19: #{transformer_lm.3} parent=11 // pred_region
          _
        $region20: #{transformer_lm.3} parent=11 // pred_fallthru
          _
        // Predicated region
        $region21: #{transformer_lm.3} parent=11 // pred_check
          %p284 = pneg %p95
        $region22: #{transformer_lm.3} parent=11 // pred_check_branch
          %286 = sbr.rel (%p284) target = $region24
        $region23: #{transformer_lm.3} parent=11 // pred_region
          _
        $region24: #{transformer_lm.3} parent=11 // pred_fallthru
          _
        // Predicated region
        $region25: #{transformer_lm.3} parent=11 // pred_check
          %p287 = pneg %p116
        $region26: #{transformer_lm.3} parent=11 // pred_check_branch
          %289 = sbr.rel (%p287) target = $region28
        $region27: #{transformer_lm.3} parent=11 // pred_region
          _
        $region28: #{transformer_lm.3} parent=11 // pred_fallthru
          _
        // Predicated region
        $region29: #{transformer_lm.3} parent=11 // pred_check
          %p290 = pneg %p137
        $region30: #{transformer_lm.3} parent=11 // pred_check_branch
          %292 = sbr.rel (%p290) target = $region32
        $region31: #{transformer_lm.3} parent=11 // pred_region
          _
        $region32: #{transformer_lm.3} parent=11 // pred_fallthru
          _
        // Predicated region
        $region33: #{transformer_lm.3} parent=11 // pred_check
          %p293 = pneg %p158
        $region34: #{transformer_lm.3} parent=11 // pred_check_branch
          %295 = sbr.rel (%p293) target = $region36
        $region35: #{transformer_lm.3} parent=11 // pred_region
          _
        $region36: #{transformer_lm.3} parent=11 // pred_fallthru
          _
        // Predicated region
        $region37: #{transformer_lm.3} parent=11 // pred_check
          %p296 = pneg %p179
        $region38: #{transformer_lm.3} parent=11 // pred_check_branch
          %298 = sbr.rel (%p296) target = $region40
        $region39: #{transformer_lm.3} parent=11 // pred_region
          _
        $region40: #{transformer_lm.3} parent=11 // pred_fallthru
          _
      $region12: #{transformer_lm.3} parent=5 // pred_fallthru
        _
      %p299 = scmp.lt.s32.totalorder %s15, 2
      // Predicated region
      $region41: #{transformer_lm.3} parent=5 // pred_check
        %p300 = pneg %p299
      $region42: #{transformer_lm.3} parent=5 // pred_check_branch
        %302 = sbr.rel (%p300) target = $region44
      $region43: #{transformer_lm.3} parent=5 // pred_region
        // Predicated region
        $region45: #{transformer_lm.3} parent=43 // pred_check
          %p303 = pneg %p199
        $region46: #{transformer_lm.3} parent=43 // pred_check_branch
          %305 = sbr.rel (%p303) target = $region48
        $region47: #{transformer_lm.3} parent=43 // pred_region
          %s306 = sand.u32 %s189, 1
          %s307 = sand.u32 %s189, 1
          %s308 = smul.addr %s307, 16
          %s309 = scalar_lea.vmem [#allocation4], %s308
          %s310 = smul.addr %s23, 4
          %s311 = scalar_lea.vmem %s7, %s310
          // Predicated region
          $region49: #{transformer_lm.3} parent=47 // pred_check
            _
          $region50: #{transformer_lm.3} parent=47 // pred_check_branch
            %313 = sbr.rel (0) target = $region52
          $region51: #{transformer_lm.3} parent=47 // pred_region
            // Predicated region
            $region53: #{transformer_lm.3} parent=51 // pred_check
              _
            $region54: #{transformer_lm.3} parent=51 // pred_check_branch
              %315 = sbr.rel target = $region56
            $region55: #{transformer_lm.3} parent=51 // pred_region
              // Predicated region
              $region68: #{transformer_lm.3} parent=55 // pred_check
                _
              $region69: #{transformer_lm.3} parent=55 // pred_check_branch
                %337 = sbr.rel (0) target = $region71
              $region70: #{transformer_lm.3} parent=55 // pred_region
                loop: start=0, step=1, limit=1
                $region72: #{transformer_lm.3} parent=70 // loop_pre_header
                  _
                $region73: #{transformer_lm.3} parent=70 // loop_header
                  %s339 = sphi 0, %s343
                  %p340 = scmp.ge.s32.totalorder %s339, 1
                  %s344 = sphi %s311, %s311
                  %s345 = sphi %s309, %s309
                $region74: #{transformer_lm.3} parent=70 // loop_header_branch
                  %342 = sbr.rel (%p340) target = $region78
                $region75: #{transformer_lm.3} parent=70 // loop_body
                  _
                $region76: #{transformer_lm.3} parent=70 // loop_footer
                  %s343 = sadd.s32 1, %s339
                $region77: #{transformer_lm.3} parent=70 // loop_footer_branch
                  %338 = sbr.rel target = $region73
                $region78: #{transformer_lm.3} parent=70 // loop_exit
                  _
                %s347 = ssub.s32 16, 1
                loop: start=0, step=1, limit=1
                $region79: #{transformer_lm.3} parent=70 // loop_pre_header
                  _
                $region80: #{transformer_lm.3} parent=70 // loop_header
                  %s349 = sphi 0, %s353
                  %p350 = scmp.ge.s32.totalorder %s349, 1
                  %s354 = sphi %s311, %s311
                  %s355 = sphi %s309, %s309
                $region81: #{transformer_lm.3} parent=70 // loop_header_branch
                  %352 = sbr.rel (%p350) target = $region85
                $region82: #{transformer_lm.3} parent=70 // loop_body
                  %v356 = vld [vmem:[%s354] sm:%s347]
                  %357 = vst [vmem:[%s355] sm:%s347] %v356
                  %v358 = vld [vmem:[%s354 + $0x8] sm:%s347]
                  %359 = vst [vmem:[%s355 + $0x4] sm:%s347] %v358
                  %v360 = vld [vmem:[%s354 + $0x10] sm:%s347]
                  %361 = vst [vmem:[%s355 + $0x8] sm:%s347] %v360
                  %v362 = vld [vmem:[%s354 + $0x18] sm:%s347]
                  %363 = vst [vmem:[%s355 + $0xc] sm:%s347] %v362
                $region83: #{transformer_lm.3} parent=70 // loop_footer
                  %s353 = sadd.s32 1, %s349
                $region84: #{transformer_lm.3} parent=70 // loop_footer_branch
                  %348 = sbr.rel target = $region80
                $region85: #{transformer_lm.3} parent=70 // loop_exit
                  _
              $region71: #{transformer_lm.3} parent=55 // pred_fallthru
                _
            $region56: #{transformer_lm.3} parent=51 // pred_fallthru
              _
            // Predicated region
            $region57: #{transformer_lm.3} parent=51 // pred_check
              _
            $region58: #{transformer_lm.3} parent=51 // pred_check_branch
              %317 = sbr.rel (0) target = $region60
            $region59: #{transformer_lm.3} parent=51 // pred_region
              %s319 = ssub.s32 16, 1
              loop: start=0, step=1, limit=1
              $region61: #{transformer_lm.3} parent=59 // loop_pre_header
                _
              $region62: #{transformer_lm.3} parent=59 // loop_header
                %s321 = sphi 0, %s325
                %p322 = scmp.ge.s32.totalorder %s321, 1
                %s326 = sphi %s311, %s311
                %s327 = sphi %s309, %s309
              $region63: #{transformer_lm.3} parent=59 // loop_header_branch
                %324 = sbr.rel (%p322) target = $region67
              $region64: #{transformer_lm.3} parent=59 // loop_body
                %v328 = vld [vmem:[%s326] sm:%s319]
                %329 = vst [vmem:[%s327] sm:%s319] %v328
                %v330 = vld [vmem:[%s326 + $0x8] sm:%s319]
                %331 = vst [vmem:[%s327 + $0x4] sm:%s319] %v330
                %v332 = vld [vmem:[%s326 + $0x10] sm:%s319]
                %333 = vst [vmem:[%s327 + $0x8] sm:%s319] %v332
                %v334 = vld [vmem:[%s326 + $0x18] sm:%s319]
                %335 = vst [vmem:[%s327 + $0xc] sm:%s319] %v334
              $region65: #{transformer_lm.3} parent=59 // loop_footer
                %s325 = sadd.s32 1, %s321
              $region66: #{transformer_lm.3} parent=59 // loop_footer_branch
                %320 = sbr.rel target = $region62
              $region67: #{transformer_lm.3} parent=59 // loop_exit
                _
            $region60: #{transformer_lm.3} parent=51 // pred_fallthru
              _
          $region52: #{transformer_lm.3} parent=47 // pred_fallthru
            _
          %364 = vnop
        $region48: #{transformer_lm.3} parent=43 // pred_fallthru
          _
        // Predicated region
        $region86: #{transformer_lm.3} parent=43 // pred_check
          %p365 = pneg %p225
        $region87: #{transformer_lm.3} parent=43 // pred_check_branch
          %367 = sbr.rel (%p365) target = $region89
        $region88: #{transformer_lm.3} parent=43 // pred_region
          %s368 = smul.u32 16, %s23
          %p369 = scmp.lt.s32.totalorder %s368, 31
          %s370 = scalar_select %p369, %s368, 31
          %s371 = smul.addr %s370, 4
          %s372 = scalar_lea.vmem %s8, %s371
          %s373 = smul.u32 16, %s23
        $region89: #{transformer_lm.3} parent=43 // pred_fallthru
          _
      $region44: #{transformer_lm.3} parent=5 // pred_fallthru
        _
      %p374 = scmp.le.s32.totalorder 1, %s15
      %p375 = scmp.lt.s32.totalorder %s15, 3
      %p376 = pnand %p374, %p375
      %p377 = pneg %p376
      // Predicated region
      $region90: #{transformer_lm.3} parent=5 // pred_check
        _
      $region91: #{transformer_lm.3} parent=5 // pred_check_branch
        %379 = sbr.rel (%p376) target = $region93
      $region92: #{transformer_lm.3} parent=5 // pred_region
        %s380 = ssub.s32 %s15, 1
        %s381 = sand.u32 %s192, 1
        %s382 = sand.u32 %s192, 1
        %s383 = smul.addr %s382, 16
        %s384 = scalar_lea.vmem [#allocation4], %s383
        // Predicated region
        $region94: #{transformer_lm.3} parent=92 // pred_check
          %p385 = pneg %p205
        $region95: #{transformer_lm.3} parent=92 // pred_check_branch
          %387 = sbr.rel (%p385) target = $region97
        $region96: #{transformer_lm.3} parent=92 // pred_region
          _
        $region97: #{transformer_lm.3} parent=92 // pred_fallthru
          _
        %s388 = smul.u32 2, %s24
        %p389 = scmp.lt.s32.totalorder %s388, 1
        %s390 = scalar_select %p389, %s388, 1
        %s391 = smul.addr %s390, 4
        %s392 = scalar_lea.vmem %s0, %s391
        %p393 = pneg %p53
        %p394 = pneg %p50
        %p395 = pneg %p74
        %p396 = pneg %p71
        %p397 = pneg %p95
        %p398 = pneg %p92
        %p399 = pneg %p116
        %p400 = pneg %p113
        %p401 = pneg %p137
        %p402 = pneg %p134
        %p403 = pneg %p158
        %p404 = pneg %p155
        %p405 = pneg %p179
        %p406 = pneg %p176
        %s407 = sand.u32 %s192, 1
        %s408 = sand.u32 %s192, 1
        %s409 = smul.addr %s408, 16
        %s410 = scalar_lea.vmem [#allocation4], %s409
        %p411 = pneg %p205
        %p412 = pneg %p202
        %s413 = smul.u32 16, %s25
        %p414 = scmp.lt.s32.totalorder %s413, 31
        %s415 = scalar_select %p414, %s413, 31
        %s416 = smul.addr %s415, 4
        %s417 = scalar_lea.vmem %s8, %s416
        %p418 = pneg %p231
        %p419 = pneg %p228
        %p420 = pneg %p257
        %p421 = pneg %p254
        %s422 = smul.u32 2, %s24
        %p423 = scmp.lt.s32.totalorder %s422, 1
        %s424 = scalar_select %p423, %s422, 1
        %s425 = smul.addr %s424, 4
        %s426 = scalar_lea.vmem %s9, %s425
        %s427 = smul.u32 2, %s24
        %p428 = scmp.lt.s32.totalorder %s427, 1
        %s429 = scalar_select %p428, %s427, 1
        %s430 = smul.addr %s429, 4
        %s431 = scalar_lea.vmem %s0, %s430
        %s432 = smul.u32 2, %s24
        %s433 = smul.u32 16, %s25
        %p434 = scmp.lt.s32.totalorder %s433, 31
        %s435 = scalar_select %p434, %s433, 31
        %s436 = smul.addr %s435, 4
        %s437 = scalar_lea.vmem %s8, %s436
        %s438 = smul.u32 16, %s25
        %s439 = smul.u32 2, %s24
        %p440 = scmp.lt.s32.totalorder %s439, 1
        %s441 = scalar_select %p440, %s439, 1
        %s442 = smul.addr %s441, 4
        %s443 = scalar_lea.vmem %s9, %s442
        %s444 = smul.u32 2, %s24
        %p446 = scmp.eq.s32.totalorder %s25, 0
        // Predicated region
        $region98: #{transformer_lm.3} parent=92 // pred_check
          %p447 = pneg %p446
        $region99: #{transformer_lm.3} parent=92 // pred_check_branch
          %449 = sbr.rel (%p447) target = $region101
        $region100: #{transformer_lm.3} parent=92 // pred_region
          %v450 = vld [vmem:[%s431] sm:$0xf]
          %v451 = vld [vmem:[%s431 + $0x4] sm:$0xf]
          %v452 = vunpack.c.l.bf16 %v450
          %v453 = vunpack.c.l.bf16 %v451
          %v454 = vld [vmem:[%s5] sm:$0x1]
          %v455 = vmul.f32 %v452, %v452
          %v456 = vmul.f32 %v453, %v453
          %vm457 = vcmask 261120
          %v458 = vsel %vm457, %v455, 0.0
          %459 = vadd.xlane.f32.xlu0 %v458
          %v460 = vpop.xlane.xlu0 %459
          %v461 = vsel %vm457, %v456, 0.0
          %462 = vadd.xlane.f32.xlu0 %v461
          %v463 = vpop.xlane.xlu0 %462
          %v464 = vrcp.pop 32.0
          %v465 = vmul.f32 %v460, %v464
          %v466 = vmul.f32 %v463, %v464
          %v467 = vadd.f32 %v465, 1e-05
          %v468 = vadd.f32 %v466, 1e-05
          %v469 = vrsqrt.pop %v467
          %v470 = vrsqrt.pop %v468
          %v471 = vmul.f32 %v452, %v469
          %v472 = vmul.f32 %v453, %v470
          %v474 = vlaneseq
          %v475 = vshrl.u32 %v474, 7
          %v476 = vsub.s32 0, %v475
          %v477 = vrot.slane %v454, %v476
          %v479 = vmul.f32 %v471, %v477
          %v480 = vmul.f32 %v472, %v477
          %v481 = vpack.c.bf16 %v480, %v479
          %v482 = vld [vmem:[%s1] sm:$0xf]
          %v483 = vld [vmem:[%s1 + $0x4] sm:$0xf]
          %v484 = vld [vmem:[%s1 + $0x8] sm:$0xf]
          %v485 = vld [vmem:[%s1 + $0xc] sm:$0xf]
          %v490 = vunpack.c.l.b16 %v482
          %v491 = vunpack.c.l.b16 %v483
          %v492 = vunpack.c.l.b16 %v484
          %v493 = vunpack.c.l.b16 %v485
          %v494 = vpack.c.b16 %v491, %v490
          %v495 = vpack.c.b16 %v493, %v492
          %v499 = vsel %vm457, %v481, 0
          %501 = vmatprep.subr.bf16.mxu0 0
          %502 = vmatpush1.bf16.msra.mxu0 0
          %503 = vmatprep.subr.bf16.mxu0 0
          %504 = vmatpush1.bf16.msra.mxu0 0
          %505 = vmatprep.subr.bf16.mxu0 0
          %506 = vmatpush1.bf16.msra.mxu0 0
          %507 = vmatprep.subr.bf16.mxu0 0
          %508 = vmatpush1.bf16.msra.mxu0 0
          %509 = vmatprep.subr.bf16.mxu0 0
          %510 = vmatpush1.bf16.msra.mxu0 0
          %511 = vmatprep.subr.bf16.mxu0 0
          %512 = vmatpush1.bf16.msra.mxu0 0
          %513 = vmatprep.subr.bf16.mxu0 0
          %514 = vmatpush1.bf16.msra.mxu0 %v495
          %515 = vmatprep.subr.bf16.mxu0 0
          %516 = vmatpush1.bf16.msra.mxu0 %v494
          %517 = vmatprep.subr.bf16.mxu0 0
          %518 = vmatpush2.bf16.msra.mxu0 0
          %519 = vmatprep.subr.bf16.mxu0 0
          %520 = vmatpush2.bf16.msra.mxu0 0
          %521 = vmatprep.subr.bf16.mxu0 0
          %522 = vmatpush2.bf16.msra.mxu0 0
          %523 = vmatprep.subr.bf16.mxu0 0
          %524 = vmatpush2.bf16.msra.mxu0 0
          %525 = vmatprep.subr.bf16.mxu0 0
          %526 = vmatpush2.bf16.msra.mxu0 0
          %527 = vmatprep.subr.bf16.mxu0 0
          %528 = vmatpush2.bf16.msra.mxu0 0
          %529 = vmatprep.subr.bf16.mxu0 0
          %530 = vmatpush2.bf16.msra.mxu0 0
          %531 = vmatprep.subr.bf16.mxu0 0
          %532 = vmatpush2.bf16.msra.mxu0 0
          %533 = vmatprep.mubr.bf16.mxu0 0
          %534 = vmatmul.mubr.bf16.gmra.mxu0 %v499
          %v535 = vpop.f32.mrf.mxu0
          %v536 = vadd.f32 0.0, %v535
          %v537 = vpop.f32.mrf.mxu0
          %v538 = vpop.f32.mrf.mxu0
          %v539 = vadd.f32 0.0, %v538
          %v540 = vpop.f32.mrf.mxu0
          %541 = vdwg.mxu0
          %v542 = vpack.c.bf16 %v536, %v536
          %v543 = vpack.c.bf16 %v539, %v539
          %v544 = vld [vmem:[%s2] sm:$0xf]
          %v545 = vld [vmem:[%s2 + $0x4] sm:$0xf]
          %v546 = vld [vmem:[%s2 + $0x8] sm:$0xf]
          %v547 = vld [vmem:[%s2 + $0xc] sm:$0xf]
          %v552 = vunpack.c.l.b16 %v544
          %v553 = vunpack.c.l.b16 %v545
          %v554 = vunpack.c.l.b16 %v546
          %v555 = vunpack.c.l.b16 %v547
          %v556 = vpack.c.b16 %v553, %v552
          %v557 = vpack.c.b16 %v555, %v554
          %560 = vmatprep.subr.bf16.mxu0 0
          %561 = vmatpush1.bf16.msra.mxu0 0
          %562 = vmatprep.subr.bf16.mxu0 0
          %563 = vmatpush1.bf16.msra.mxu0 0
          %564 = vmatprep.subr.bf16.mxu0 0
          %565 = vmatpush1.bf16.msra.mxu0 0
          %566 = vmatprep.subr.bf16.mxu0 0
          %567 = vmatpush1.bf16.msra.mxu0 0
          %568 = vmatprep.subr.bf16.mxu0 0
          %569 = vmatpush1.bf16.msra.mxu0 0
          %570 = vmatprep.subr.bf16.mxu0 0
          %571 = vmatpush1.bf16.msra.mxu0 0
          %572 = vmatprep.subr.bf16.mxu0 0
          %573 = vmatpush1.bf16.msra.mxu0 %v557
          %574 = vmatprep.subr.bf16.mxu0 0
          %575 = vmatpush1.bf16.msra.mxu0 %v556
          %576 = vmatprep.subr.bf16.mxu0 0
          %577 = vmatpush2.bf16.msra.mxu0 0
          %578 = vmatprep.subr.bf16.mxu0 0
          %579 = vmatpush2.bf16.msra.mxu0 0
          %580 = vmatprep.subr.bf16.mxu0 0
          %581 = vmatpush2.bf16.msra.mxu0 0
          %582 = vmatprep.subr.bf16.mxu0 0
          %583 = vmatpush2.bf16.msra.mxu0 0
          %584 = vmatprep.subr.bf16.mxu0 0
          %585 = vmatpush2.bf16.msra.mxu0 0
          %586 = vmatprep.subr.bf16.mxu0 0
          %587 = vmatpush2.bf16.msra.mxu0 0
          %588 = vmatprep.subr.bf16.mxu0 0
          %589 = vmatpush2.bf16.msra.mxu0 0
          %590 = vmatprep.subr.bf16.mxu0 0
          %591 = vmatpush2.bf16.msra.mxu0 0
          %592 = vmatprep.mubr.bf16.mxu0 0
          %593 = vmatmul.mubr.bf16.gmra.mxu0 %v499
          %v594 = vpop.f32.mrf.mxu0
          %v595 = vadd.f32 0.0, %v594
          %v596 = vpop.f32.mrf.mxu0
          %v597 = vpop.f32.mrf.mxu0
          %v598 = vadd.f32 0.0, %v597
          %v599 = vpop.f32.mrf.mxu0
          %600 = vdwg.mxu0
          %v601 = vpack.c.bf16 %v595, %v595
          %v602 = vpack.c.bf16 %v598, %v598
          %v603 = vld [vmem:[%s3] sm:$0xf]
          %v604 = vld [vmem:[%s3 + $0x4] sm:$0xf]
          %v605 = vld [vmem:[%s3 + $0x8] sm:$0xf]
          %v606 = vld [vmem:[%s3 + $0xc] sm:$0xf]
          %v611 = vunpack.c.l.b16 %v603
          %v612 = vunpack.c.l.b16 %v604
          %v613 = vunpack.c.l.b16 %v605
          %v614 = vunpack.c.l.b16 %v606
          %v615 = vpack.c.b16 %v612, %v611
          %v616 = vpack.c.b16 %v614, %v613
          %619 = vmatprep.subr.bf16.mxu0 0
          %620 = vmatpush1.bf16.msra.mxu0 0
          %621 = vmatprep.subr.bf16.mxu0 0
          %622 = vmatpush1.bf16.msra.mxu0 0
          %623 = vmatprep.subr.bf16.mxu0 0
          %624 = vmatpush1.bf16.msra.mxu0 0
          %625 = vmatprep.subr.bf16.mxu0 0
          %626 = vmatpush1.bf16.msra.mxu0 0
          %627 = vmatprep.subr.bf16.mxu0 0
          %628 = vmatpush1.bf16.msra.mxu0 0
          %629 = vmatprep.subr.bf16.mxu0 0
          %630 = vmatpush1.bf16.msra.mxu0 0
          %631 = vmatprep.subr.bf16.mxu0 0
          %632 = vmatpush1.bf16.msra.mxu0 %v616
          %633 = vmatprep.subr.bf16.mxu0 0
          %634 = vmatpush1.bf16.msra.mxu0 %v615
          %635 = vmatprep.subr.bf16.mxu0 0
          %636 = vmatpush2.bf16.msra.mxu0 0
          %637 = vmatprep.subr.bf16.mxu0 0
          %638 = vmatpush2.bf16.msra.mxu0 0
          %639 = vmatprep.subr.bf16.mxu0 0
          %640 = vmatpush2.bf16.msra.mxu0 0
          %641 = vmatprep.subr.bf16.mxu0 0
          %642 = vmatpush2.bf16.msra.mxu0 0
          %643 = vmatprep.subr.bf16.mxu0 0
          %644 = vmatpush2.bf16.msra.mxu0 0
          %645 = vmatprep.subr.bf16.mxu0 0
          %646 = vmatpush2.bf16.msra.mxu0 0
          %647 = vmatprep.subr.bf16.mxu0 0
          %648 = vmatpush2.bf16.msra.mxu0 0
          %649 = vmatprep.subr.bf16.mxu0 0
          %650 = vmatpush2.bf16.msra.mxu0 0
          %651 = vmatprep.mubr.bf16.mxu0 0
          %652 = vmatmul.mubr.bf16.gmra.mxu0 %v499
          %v653 = vpop.f32.mrf.mxu0
          %v654 = vadd.f32 0.0, %v653
          %v655 = vpop.f32.mrf.mxu0
          %v656 = vpop.f32.mrf.mxu0
          %v657 = vadd.f32 0.0, %v656
          %v658 = vpop.f32.mrf.mxu0
          %659 = vdwg.mxu0
          %v660 = vpack.c.bf16 %v654, %v654
          %v661 = vpack.c.bf16 %v657, %v657
          %662 = vst.msk [vmem:[#allocation2] sm:$0xff] %vm457, %v452
          %663 = vst.msk [vmem:[#allocation2 + $0x8] sm:$0xff] %vm457, %v453
          %v664 = vlaneseq
          %v665 = vshrl.u32 %v664, 7
          %v666 = vlaneseq
          %v667 = vand.u32 %v666, 127
          %vm668 = vcmp.gt.s32.totalorder %v667, %v665
          %vm669 = vcmask 64512
          %v671 = vsel %vm669, %v542, 0
          %v674 = vsel %vm669, %v601, 0
          %676 = vmatprep.subr.bf16.mxu0 0
          %677 = vmatpush1.bf16.xpose.msra.mxu0 0
          %678 = vmatprep.subr.bf16.mxu0 0
          %679 = vmatpush1.bf16.xpose.msra.mxu0 0
          %680 = vmatprep.subr.bf16.mxu0 0
          %681 = vmatpush1.bf16.xpose.msra.mxu0 0
          %682 = vmatprep.subr.bf16.mxu0 0
          %683 = vmatpush1.bf16.xpose.msra.mxu0 0
          %684 = vmatprep.subr.bf16.mxu0 0
          %685 = vmatpush1.bf16.xpose.msra.mxu0 0
          %686 = vmatprep.subr.bf16.mxu0 0
          %687 = vmatpush1.bf16.xpose.msra.mxu0 0
          %688 = vmatprep.subr.bf16.mxu0 0
          %689 = vmatpush1.bf16.xpose.msra.mxu0 0
          %690 = vmatprep.subr.bf16.mxu0 0
          %691 = vmatpush1.bf16.xpose.msra.mxu0 %v674
          %692 = vmatprep.subr.bf16.mxu0 0
          %693 = vmatpush2.bf16.xpose.msra.mxu0 0
          %694 = vmatprep.subr.bf16.mxu0 0
          %695 = vmatpush2.bf16.xpose.msra.mxu0 0
          %696 = vmatprep.subr.bf16.mxu0 0
          %697 = vmatpush2.bf16.xpose.msra.mxu0 0
          %698 = vmatprep.subr.bf16.mxu0 0
          %699 = vmatpush2.bf16.xpose.msra.mxu0 0
          %700 = vmatprep.subr.bf16.mxu0 0
          %701 = vmatpush2.bf16.xpose.msra.mxu0 0
          %702 = vmatprep.subr.bf16.mxu0 0
          %703 = vmatpush2.bf16.xpose.msra.mxu0 0
          %704 = vmatprep.subr.bf16.mxu0 0
          %705 = vmatpush2.bf16.xpose.msra.mxu0 0
          %706 = vmatprep.subr.bf16.mxu0 0
          %707 = vmatpush2.bf16.xpose.msra.mxu0 0
          %708 = vmatprep.mubr.bf16.mxu0 0
          %709 = vmatmul.mubr.bf16.gmra.mxu0 %v671
          %v710 = vpop.f32.mrf.mxu0
          %v711 = vadd.f32 0.0, %v710
          %v712 = vpop.f32.mrf.mxu0
          %v713 = vpop.f32.mrf.mxu0
          %v714 = vpop.f32.mrf.mxu0
          %715 = vdwg.mxu0
          %v717 = vsel %vm669, %v543, 0
          %v720 = vsel %vm669, %v602, 0
          %722 = vmatprep.subr.bf16.mxu0 0
          %723 = vmatpush1.bf16.xpose.msra.mxu0 0
          %724 = vmatprep.subr.bf16.mxu0 0
          %725 = vmatpush1.bf16.xpose.msra.mxu0 0
          %726 = vmatprep.subr.bf16.mxu0 0
          %727 = vmatpush1.bf16.xpose.msra.mxu0 0
          %728 = vmatprep.subr.bf16.mxu0 0
          %729 = vmatpush1.bf16.xpose.msra.mxu0 0
          %730 = vmatprep.subr.bf16.mxu0 0
          %731 = vmatpush1.bf16.xpose.msra.mxu0 0
          %732 = vmatprep.subr.bf16.mxu0 0
          %733 = vmatpush1.bf16.xpose.msra.mxu0 0
          %734 = vmatprep.subr.bf16.mxu0 0
          %735 = vmatpush1.bf16.xpose.msra.mxu0 0
          %736 = vmatprep.subr.bf16.mxu0 0
          %737 = vmatpush1.bf16.xpose.msra.mxu0 %v720
          %738 = vmatprep.subr.bf16.mxu0 0
          %739 = vmatpush2.bf16.xpose.msra.mxu0 0
          %740 = vmatprep.subr.bf16.mxu0 0
          %741 = vmatpush2.bf16.xpose.msra.mxu0 0
          %742 = vmatprep.subr.bf16.mxu0 0
          %743 = vmatpush2.bf16.xpose.msra.mxu0 0
          %744 = vmatprep.subr.bf16.mxu0 0
          %745 = vmatpush2.bf16.xpose.msra.mxu0 0
          %746 = vmatprep.subr.bf16.mxu0 0
          %747 = vmatpush2.bf16.xpose.msra.mxu0 0
          %748 = vmatprep.subr.bf16.mxu0 0
          %749 = vmatpush2.bf16.xpose.msra.mxu0 0
          %750 = vmatprep.subr.bf16.mxu0 0
          %751 = vmatpush2.bf16.xpose.msra.mxu0 0
          %752 = vmatprep.subr.bf16.mxu0 0
          %753 = vmatpush2.bf16.xpose.msra.mxu0 0
          %754 = vmatprep.mubr.bf16.mxu0 0
          %755 = vmatmul.mubr.bf16.gmra.mxu0 %v717
          %v756 = vpop.f32.mrf.mxu0
          %v757 = vadd.f32 0.0, %v756
          %v758 = vpop.f32.mrf.mxu0
          %v759 = vpop.f32.mrf.mxu0
          %v760 = vpop.f32.mrf.mxu0
          %761 = vdwg.mxu0
          %v762 = vsel %vm668, 1, 0
          %vm763 = vcmp.eq.s32.totalorder %v762, 1
          %v764 = vsel %vm763, -inf, %v711
          %v765 = vsel %vm763, -inf, %v757
          %v766 = vsel %vm669, %v764, -inf
          %767 = vmax.xlane.f32.xlu0 %v766
          %v768 = vpop.xlane.xlu0 %767
          %v769 = vsel %vm669, %v765, -inf
          %770 = vmax.xlane.f32.xlu0 %v769
          %v771 = vpop.xlane.xlu0 %770
          %v772 = vsub.f32 %v764, %v768
          %v773 = vsub.f32 %v765, %v771
          %v774 = vpack.c.bf16 %v772, %v772
          %v775 = vpack.c.bf16 %v773, %v773
          %v777 = vmul.bf16 %v774, 1069105081
          %v778 = vpow.bf16.pop %v777
          %v780 = vmul.bf16 %v775, 1069105081
          %v781 = vpow.bf16.pop %v780
          %v782 = vunpack.c.l.bf16 %v778
          %v783 = vunpack.c.l.bf16 %v781
          %v784 = vsel %vm669, %v782, 0.0
          %785 = vadd.xlane.f32.xlu0 %v784
          %v786 = vpop.xlane.xlu0 %785
          %v787 = vsel %vm669, %v783, 0.0
          %788 = vadd.xlane.f32.xlu0 %v787
          %v789 = vpop.xlane.xlu0 %788
          %v790 = vrcp.pop %v786
          %v791 = vrcp.pop %v789
          %v792 = vpack.c.bf16 %v790, %v790
          %v793 = vpack.c.bf16 %v791, %v791
          %v794 = vmul.bf16 %v778, %v792
          %v795 = vmul.bf16 %v781, %v793
          %v797 = vsel %vm669, %v794, 0
          %vm799 = vcmask 1043456
          %v801 = vsel %vm799, %v660, 0
          %803 = vmatprep.subr.bf16.mxu0 0
          %804 = vmatpush1.bf16.msra.mxu0 0
          %805 = vmatprep.subr.bf16.mxu0 0
          %806 = vmatpush1.bf16.msra.mxu0 0
          %807 = vmatprep.subr.bf16.mxu0 0
          %808 = vmatpush1.bf16.msra.mxu0 0
          %809 = vmatprep.subr.bf16.mxu0 0
          %810 = vmatpush1.bf16.msra.mxu0 0
          %811 = vmatprep.subr.bf16.mxu0 0
          %812 = vmatpush1.bf16.msra.mxu0 0
          %813 = vmatprep.subr.bf16.mxu0 0
          %814 = vmatpush1.bf16.msra.mxu0 0
          %815 = vmatprep.subr.bf16.mxu0 0
          %816 = vmatpush1.bf16.msra.mxu0 0
          %817 = vmatprep.subr.bf16.mxu0 0
          %818 = vmatpush1.bf16.msra.mxu0 %v801
          %819 = vmatprep.subr.bf16.mxu0 0
          %820 = vmatpush2.bf16.msra.mxu0 0
          %821 = vmatprep.subr.bf16.mxu0 0
          %822 = vmatpush2.bf16.msra.mxu0 0
          %823 = vmatprep.subr.bf16.mxu0 0
          %824 = vmatpush2.bf16.msra.mxu0 0
          %825 = vmatprep.subr.bf16.mxu0 0
          %826 = vmatpush2.bf16.msra.mxu0 0
          %827 = vmatprep.subr.bf16.mxu0 0
          %828 = vmatpush2.bf16.msra.mxu0 0
          %829 = vmatprep.subr.bf16.mxu0 0
          %830 = vmatpush2.bf16.msra.mxu0 0
          %831 = vmatprep.subr.bf16.mxu0 0
          %832 = vmatpush2.bf16.msra.mxu0 0
          %833 = vmatprep.subr.bf16.mxu0 0
          %834 = vmatpush2.bf16.msra.mxu0 0
          %835 = vmatprep.mubr.bf16.mxu0 0
          %836 = vmatmul.mubr.bf16.gmra.mxu0 %v797
          %v837 = vpop.f32.mrf.mxu0
          %v838 = vadd.f32 0.0, %v837
          %v839 = vpop.f32.mrf.mxu0
          %v840 = vpop.f32.mrf.mxu0
          %v841 = vpop.f32.mrf.mxu0
          %842 = vdwg.mxu0
          %v844 = vsel %vm669, %v795, 0
          %v847 = vsel %vm799, %v661, 0
          %849 = vmatprep.subr.bf16.mxu0 0
          %850 = vmatpush1.bf16.msra.mxu0 0
          %851 = vmatprep.subr.bf16.mxu0 0
          %852 = vmatpush1.bf16.msra.mxu0 0
          %853 = vmatprep.subr.bf16.mxu0 0
          %854 = vmatpush1.bf16.msra.mxu0 0
          %855 = vmatprep.subr.bf16.mxu0 0
          %856 = vmatpush1.bf16.msra.mxu0 0
          %857 = vmatprep.subr.bf16.mxu0 0
          %858 = vmatpush1.bf16.msra.mxu0 0
          %859 = vmatprep.subr.bf16.mxu0 0
          %860 = vmatpush1.bf16.msra.mxu0 0
          %861 = vmatprep.subr.bf16.mxu0 0
          %862 = vmatpush1.bf16.msra.mxu0 0
          %863 = vmatprep.subr.bf16.mxu0 0
          %864 = vmatpush1.bf16.msra.mxu0 %v847
          %865 = vmatprep.subr.bf16.mxu0 0
          %866 = vmatpush2.bf16.msra.mxu0 0
          %867 = vmatprep.subr.bf16.mxu0 0
          %868 = vmatpush2.bf16.msra.mxu0 0
          %869 = vmatprep.subr.bf16.mxu0 0
          %870 = vmatpush2.bf16.msra.mxu0 0
          %871 = vmatprep.subr.bf16.mxu0 0
          %872 = vmatpush2.bf16.msra.mxu0 0
          %873 = vmatprep.subr.bf16.mxu0 0
          %874 = vmatpush2.bf16.msra.mxu0 0
          %875 = vmatprep.subr.bf16.mxu0 0
          %876 = vmatpush2.bf16.msra.mxu0 0
          %877 = vmatprep.subr.bf16.mxu0 0
          %878 = vmatpush2.bf16.msra.mxu0 0
          %879 = vmatprep.subr.bf16.mxu0 0
          %880 = vmatpush2.bf16.msra.mxu0 0
          %881 = vmatprep.mubr.bf16.mxu0 0
          %882 = vmatmul.mubr.bf16.gmra.mxu0 %v844
          %v883 = vpop.f32.mrf.mxu0
          %v884 = vadd.f32 0.0, %v883
          %v885 = vpop.f32.mrf.mxu0
          %v886 = vpop.f32.mrf.mxu0
          %v887 = vpop.f32.mrf.mxu0
          %888 = vdwg.mxu0
          %v889 = vpack.c.bf16 %v884, %v838
          %v890 = vld [vmem:[%s4] sm:$0xf]
          %892 = vrot.lane.b32.xlu0 %v542, 120
          %v893 = vpop.permute.xlu0 %892
          %895 = vrot.lane.b32.xlu0 %v601, 120
          %v896 = vpop.permute.xlu0 %895
          %v898 = vsel %vm669, %v893, 0
          %v901 = vsel %vm669, %v896, 0
          %903 = vmatprep.subr.bf16.mxu0 0
          %904 = vmatpush1.bf16.xpose.msra.mxu0 0
          %905 = vmatprep.subr.bf16.mxu0 0
          %906 = vmatpush1.bf16.xpose.msra.mxu0 0
          %907 = vmatprep.subr.bf16.mxu0 0
          %908 = vmatpush1.bf16.xpose.msra.mxu0 0
          %909 = vmatprep.subr.bf16.mxu0 0
          %910 = vmatpush1.bf16.xpose.msra.mxu0 0
          %911 = vmatprep.subr.bf16.mxu0 0
          %912 = vmatpush1.bf16.xpose.msra.mxu0 0
          %913 = vmatprep.subr.bf16.mxu0 0
          %914 = vmatpush1.bf16.xpose.msra.mxu0 0
          %915 = vmatprep.subr.bf16.mxu0 0
          %916 = vmatpush1.bf16.xpose.msra.mxu0 0
          %917 = vmatprep.subr.bf16.mxu0 0
          %918 = vmatpush1.bf16.xpose.msra.mxu0 %v901
          %919 = vmatprep.subr.bf16.mxu0 0
          %920 = vmatpush2.bf16.xpose.msra.mxu0 0
          %921 = vmatprep.subr.bf16.mxu0 0
          %922 = vmatpush2.bf16.xpose.msra.mxu0 0
          %923 = vmatprep.subr.bf16.mxu0 0
          %924 = vmatpush2.bf16.xpose.msra.mxu0 0
          %925 = vmatprep.subr.bf16.mxu0 0
          %926 = vmatpush2.bf16.xpose.msra.mxu0 0
          %927 = vmatprep.subr.bf16.mxu0 0
          %928 = vmatpush2.bf16.xpose.msra.mxu0 0
          %929 = vmatprep.subr.bf16.mxu0 0
          %930 = vmatpush2.bf16.xpose.msra.mxu0 0
          %931 = vmatprep.subr.bf16.mxu0 0
          %932 = vmatpush2.bf16.xpose.msra.mxu0 0
          %933 = vmatprep.subr.bf16.mxu0 0
          %934 = vmatpush2.bf16.xpose.msra.mxu0 0
          %935 = vmatprep.mubr.bf16.mxu0 0
          %936 = vmatmul.mubr.bf16.gmra.mxu0 %v898
          %v937 = vpop.f32.mrf.mxu0
          %v938 = vadd.f32 0.0, %v937
          %v939 = vpop.f32.mrf.mxu0
          %v940 = vpop.f32.mrf.mxu0
          %v941 = vpop.f32.mrf.mxu0
          %942 = vdwg.mxu0
          %944 = vrot.lane.b32.xlu0 %v543, 120
          %v945 = vpop.permute.xlu0 %944
          %947 = vrot.lane.b32.xlu0 %v602, 120
          %v948 = vpop.permute.xlu0 %947
          %v950 = vsel %vm669, %v945, 0
          %v953 = vsel %vm669, %v948, 0
          %955 = vmatprep.subr.bf16.mxu0 0
          %956 = vmatpush1.bf16.xpose.msra.mxu0 0
          %957 = vmatprep.subr.bf16.mxu0 0
          %958 = vmatpush1.bf16.xpose.msra.mxu0 0
          %959 = vmatprep.subr.bf16.mxu0 0
          %960 = vmatpush1.bf16.xpose.msra.mxu0 0
          %961 = vmatprep.subr.bf16.mxu0 0
          %962 = vmatpush1.bf16.xpose.msra.mxu0 0
          %963 = vmatprep.subr.bf16.mxu0 0
          %964 = vmatpush1.bf16.xpose.msra.mxu0 0
          %965 = vmatprep.subr.bf16.mxu0 0
          %966 = vmatpush1.bf16.xpose.msra.mxu0 0
          %967 = vmatprep.subr.bf16.mxu0 0
          %968 = vmatpush1.bf16.xpose.msra.mxu0 0
          %969 = vmatprep.subr.bf16.mxu0 0
          %970 = vmatpush1.bf16.xpose.msra.mxu0 %v953
          %971 = vmatprep.subr.bf16.mxu0 0
          %972 = vmatpush2.bf16.xpose.msra.mxu0 0
          %973 = vmatprep.subr.bf16.mxu0 0
          %974 = vmatpush2.bf16.xpose.msra.mxu0 0
          %975 = vmatprep.subr.bf16.mxu0 0
          %976 = vmatpush2.bf16.xpose.msra.mxu0 0
          %977 = vmatprep.subr.bf16.mxu0 0
          %978 = vmatpush2.bf16.xpose.msra.mxu0 0
          %979 = vmatprep.subr.bf16.mxu0 0
          %980 = vmatpush2.bf16.xpose.msra.mxu0 0
          %981 = vmatprep.subr.bf16.mxu0 0
          %982 = vmatpush2.bf16.xpose.msra.mxu0 0
          %983 = vmatprep.subr.bf16.mxu0 0
          %984 = vmatpush2.bf16.xpose.msra.mxu0 0
          %985 = vmatprep.subr.bf16.mxu0 0
          %986 = vmatpush2.bf16.xpose.msra.mxu0 0
          %987 = vmatprep.mubr.bf16.mxu0 0
          %988 = vmatmul.mubr.bf16.gmra.mxu0 %v950
          %v989 = vpop.f32.mrf.mxu0
          %v990 = vadd.f32 0.0, %v989
          %v991 = vpop.f32.mrf.mxu0
          %v992 = vpop.f32.mrf.mxu0
          %v993 = vpop.f32.mrf.mxu0
          %994 = vdwg.mxu0
          %v995 = vsel %vm763, -inf, %v938
          %v996 = vsel %vm763, -inf, %v990
          %v997 = vsel %vm669, %v995, -inf
          %998 = vmax.xlane.f32.xlu0 %v997
          %v999 = vpop.xlane.xlu0 %998
          %v1000 = vsel %vm669, %v996, -inf
          %1001 = vmax.xlane.f32.xlu0 %v1000
          %v1002 = vpop.xlane.xlu0 %1001
          %v1003 = vsub.f32 %v995, %v999
          %v1004 = vsub.f32 %v996, %v1002
          %v1005 = vpack.c.bf16 %v1003, %v1003
          %v1006 = vpack.c.bf16 %v1004, %v1004
          %v1008 = vmul.bf16 %v1005, 1069105081
          %v1009 = vpow.bf16.pop %v1008
          %v1011 = vmul.bf16 %v1006, 1069105081
          %v1012 = vpow.bf16.pop %v1011
          %v1013 = vunpack.c.l.bf16 %v1009
          %v1014 = vunpack.c.l.bf16 %v1012
          %v1015 = vsel %vm669, %v1013, 0.0
          %1016 = vadd.xlane.f32.xlu0 %v1015
          %v1017 = vpop.xlane.xlu0 %1016
          %v1018 = vsel %vm669, %v1014, 0.0
          %1019 = vadd.xlane.f32.xlu0 %v1018
          %v1020 = vpop.xlane.xlu0 %1019
          %v1021 = vrcp.pop %v1017
          %v1022 = vrcp.pop %v1020
          %v1023 = vpack.c.bf16 %v1021, %v1021
          %v1024 = vpack.c.bf16 %v1022, %v1022
          %v1025 = vmul.bf16 %v1009, %v1023
          %v1026 = vmul.bf16 %v1012, %v1024
          %1028 = vrot.lane.b32.xlu0 %v660, 120
          %v1029 = vpop.permute.xlu0 %1028
          %v1031 = vsel %vm669, %v1025, 0
          %v1034 = vsel %vm799, %v1029, 0
          %1036 = vmatprep.subr.bf16.mxu0 0
          %1037 = vmatpush1.bf16.msra.mxu0 0
          %1038 = vmatprep.subr.bf16.mxu0 0
          %1039 = vmatpush1.bf16.msra.mxu0 0
          %1040 = vmatprep.subr.bf16.mxu0 0
          %1041 = vmatpush1.bf16.msra.mxu0 0
          %1042 = vmatprep.subr.bf16.mxu0 0
          %1043 = vmatpush1.bf16.msra.mxu0 0
          %1044 = vmatprep.subr.bf16.mxu0 0
          %1045 = vmatpush1.bf16.msra.mxu0 0
          %1046 = vmatprep.subr.bf16.mxu0 0
          %1047 = vmatpush1.bf16.msra.mxu0 0
          %1048 = vmatprep.subr.bf16.mxu0 0
          %1049 = vmatpush1.bf16.msra.mxu0 0
          %1050 = vmatprep.subr.bf16.mxu0 0
          %1051 = vmatpush1.bf16.msra.mxu0 %v1034
          %1052 = vmatprep.subr.bf16.mxu0 0
          %1053 = vmatpush2.bf16.msra.mxu0 0
          %1054 = vmatprep.subr.bf16.mxu0 0
          %1055 = vmatpush2.bf16.msra.mxu0 0
          %1056 = vmatprep.subr.bf16.mxu0 0
          %1057 = vmatpush2.bf16.msra.mxu0 0
          %1058 = vmatprep.subr.bf16.mxu0 0
          %1059 = vmatpush2.bf16.msra.mxu0 0
          %1060 = vmatprep.subr.bf16.mxu0 0
          %1061 = vmatpush2.bf16.msra.mxu0 0
          %1062 = vmatprep.subr.bf16.mxu0 0
          %1063 = vmatpush2.bf16.msra.mxu0 0
          %1064 = vmatprep.subr.bf16.mxu0 0
          %1065 = vmatpush2.bf16.msra.mxu0 0
          %1066 = vmatprep.subr.bf16.mxu0 0
          %1067 = vmatpush2.bf16.msra.mxu0 0
          %1068 = vmatprep.mubr.bf16.mxu0 0
          %1069 = vmatmul.mubr.bf16.gmra.mxu0 %v1031
          %v1070 = vpop.f32.mrf.mxu0
          %v1071 = vadd.f32 0.0, %v1070
          %v1072 = vpop.f32.mrf.mxu0
          %v1073 = vpop.f32.mrf.mxu0
          %v1074 = vpop.f32.mrf.mxu0
          %1075 = vdwg.mxu0
          %1077 = vrot.lane.b32.xlu0 %v661, 120
          %v1078 = vpop.permute.xlu0 %1077
          %v1080 = vsel %vm669, %v1026, 0
          %v1083 = vsel %vm799, %v1078, 0
          %1085 = vmatprep.subr.bf16.mxu0 0
          %1086 = vmatpush1.bf16.msra.mxu0 0
          %1087 = vmatprep.subr.bf16.mxu0 0
          %1088 = vmatpush1.bf16.msra.mxu0 0
          %1089 = vmatprep.subr.bf16.mxu0 0
          %1090 = vmatpush1.bf16.msra.mxu0 0
          %1091 = vmatprep.subr.bf16.mxu0 0
          %1092 = vmatpush1.bf16.msra.mxu0 0
          %1093 = vmatprep.subr.bf16.mxu0 0
          %1094 = vmatpush1.bf16.msra.mxu0 0
          %1095 = vmatprep.subr.bf16.mxu0 0
          %1096 = vmatpush1.bf16.msra.mxu0 0
          %1097 = vmatprep.subr.bf16.mxu0 0
          %1098 = vmatpush1.bf16.msra.mxu0 0
          %1099 = vmatprep.subr.bf16.mxu0 0
          %1100 = vmatpush1.bf16.msra.mxu0 %v1083
          %1101 = vmatprep.subr.bf16.mxu0 0
          %1102 = vmatpush2.bf16.msra.mxu0 0
          %1103 = vmatprep.subr.bf16.mxu0 0
          %1104 = vmatpush2.bf16.msra.mxu0 0
          %1105 = vmatprep.subr.bf16.mxu0 0
          %1106 = vmatpush2.bf16.msra.mxu0 0
          %1107 = vmatprep.subr.bf16.mxu0 0
          %1108 = vmatpush2.bf16.msra.mxu0 0
          %1109 = vmatprep.subr.bf16.mxu0 0
          %1110 = vmatpush2.bf16.msra.mxu0 0
          %1111 = vmatprep.subr.bf16.mxu0 0
          %1112 = vmatpush2.bf16.msra.mxu0 0
          %1113 = vmatprep.subr.bf16.mxu0 0
          %1114 = vmatpush2.bf16.msra.mxu0 0
          %1115 = vmatprep.subr.bf16.mxu0 0
          %1116 = vmatpush2.bf16.msra.mxu0 0
          %1117 = vmatprep.mubr.bf16.mxu0 0
          %1118 = vmatmul.mubr.bf16.gmra.mxu0 %v1080
          %v1119 = vpop.f32.mrf.mxu0
          %v1120 = vadd.f32 0.0, %v1119
          %v1121 = vpop.f32.mrf.mxu0
          %v1122 = vpop.f32.mrf.mxu0
          %v1123 = vpop.f32.mrf.mxu0
          %1124 = vdwg.mxu0
          %v1125 = vpack.c.bf16 %v1120, %v1071
          %v1126 = vld [vmem:[%s4 + $0x4] sm:$0xf]
          %v1128 = vsel %vm669, %v1125, 0
          %v1131 = vsel %vm799, %v1126, 0
          %1133 = vmatprep.subr.bf16.mxu0 0
          %1134 = vmatpush1.bf16.msra.mxu0 0
          %1135 = vmatprep.subr.bf16.mxu0 0
          %1136 = vmatpush1.bf16.msra.mxu0 0
          %1137 = vmatprep.subr.bf16.mxu0 0
          %1138 = vmatpush1.bf16.msra.mxu0 0
          %1139 = vmatprep.subr.bf16.mxu0 0
          %1140 = vmatpush1.bf16.msra.mxu0 0
          %1141 = vmatprep.subr.bf16.mxu0 0
          %1142 = vmatpush1.bf16.msra.mxu0 0
          %1143 = vmatprep.subr.bf16.mxu0 0
          %1144 = vmatpush1.bf16.msra.mxu0 0
          %1145 = vmatprep.subr.bf16.mxu0 0
          %1146 = vmatpush1.bf16.msra.mxu0 0
          %1147 = vmatprep.subr.bf16.mxu0 0
          %1148 = vmatpush1.bf16.msra.mxu0 %v1131
          %1149 = vmatprep.subr.bf16.mxu0 0
          %1150 = vmatpush2.bf16.msra.mxu0 0
          %1151 = vmatprep.subr.bf16.mxu0 0
          %1152 = vmatpush2.bf16.msra.mxu0 0
          %1153 = vmatprep.subr.bf16.mxu0 0
          %1154 = vmatpush2.bf16.msra.mxu0 0
          %1155 = vmatprep.subr.bf16.mxu0 0
          %1156 = vmatpush2.bf16.msra.mxu0 0
          %1157 = vmatprep.subr.bf16.mxu0 0
          %1158 = vmatpush2.bf16.msra.mxu0 0
          %1159 = vmatprep.subr.bf16.mxu0 0
          %1160 = vmatpush2.bf16.msra.mxu0 0
          %1161 = vmatprep.subr.bf16.mxu0 0
          %1162 = vmatpush2.bf16.msra.mxu0 0
          %1163 = vmatprep.subr.bf16.mxu0 0
          %1164 = vmatpush2.bf16.msra.mxu0 0
          %1165 = vmatprep.mubr.bf16.mxu0 0
          %1166 = vmatmul.mubr.bf16.gmra.mxu0 %v1128
          %v1167 = vpop.f32.mrf.mxu0
          %v1168 = vadd.f32 0.0, %v1167
          %v1169 = vpop.f32.mrf.mxu0
          %v1170 = vpop.f32.mrf.mxu0
          %v1171 = vadd.f32 0.0, %v1170
          %v1172 = vpop.f32.mrf.mxu0
          %1173 = vdwg.mxu0
          %v1175 = vsel %vm669, %v889, 0
          %v1178 = vsel %vm799, %v890, 0
          %1180 = vmatprep.subr.bf16.mxu0 0
          %1181 = vmatpush1.bf16.msra.mxu0 0
          %1182 = vmatprep.subr.bf16.mxu0 0
          %1183 = vmatpush1.bf16.msra.mxu0 0
          %1184 = vmatprep.subr.bf16.mxu0 0
          %1185 = vmatpush1.bf16.msra.mxu0 0
          %1186 = vmatprep.subr.bf16.mxu0 0
          %1187 = vmatpush1.bf16.msra.mxu0 0
          %1188 = vmatprep.subr.bf16.mxu0 0
          %1189 = vmatpush1.bf16.msra.mxu0 0
          %1190 = vmatprep.subr.bf16.mxu0 0
          %1191 = vmatpush1.bf16.msra.mxu0 0
          %1192 = vmatprep.subr.bf16.mxu0 0
          %1193 = vmatpush1.bf16.msra.mxu0 0
          %1194 = vmatprep.subr.bf16.mxu0 0
          %1195 = vmatpush1.bf16.msra.mxu0 %v1178
          %1196 = vmatprep.subr.bf16.mxu0 0
          %1197 = vmatpush2.bf16.msra.mxu0 0
          %1198 = vmatprep.subr.bf16.mxu0 0
          %1199 = vmatpush2.bf16.msra.mxu0 0
          %1200 = vmatprep.subr.bf16.mxu0 0
          %1201 = vmatpush2.bf16.msra.mxu0 0
          %1202 = vmatprep.subr.bf16.mxu0 0
          %1203 = vmatpush2.bf16.msra.mxu0 0
          %1204 = vmatprep.subr.bf16.mxu0 0
          %1205 = vmatpush2.bf16.msra.mxu0 0
          %1206 = vmatprep.subr.bf16.mxu0 0
          %1207 = vmatpush2.bf16.msra.mxu0 0
          %1208 = vmatprep.subr.bf16.mxu0 0
          %1209 = vmatpush2.bf16.msra.mxu0 0
          %1210 = vmatprep.subr.bf16.mxu0 0
          %1211 = vmatpush2.bf16.msra.mxu0 0
          %1212 = vmatprep.mubr.bf16.mxu0 0
          %1213 = vmatmul.mubr.bf16.gmra.mxu0 %v1175
          %v1214 = vpop.f32.mrf.mxu0
          %v1215 = vadd.f32 %v1168, %v1214
          %v1216 = vpop.f32.mrf.mxu0
          %v1217 = vpop.f32.mrf.mxu0
          %v1218 = vadd.f32 %v1171, %v1217
          %v1219 = vpop.f32.mrf.mxu0
          %1220 = vdwg.mxu0
          %1221 = vrot.lane.b32.xlu0 %v542, 112
          %v1222 = vpop.permute.xlu0 %1221
          %1223 = vrot.lane.b32.xlu0 %v601, 112
          %v1224 = vpop.permute.xlu0 %1223
          %v1226 = vsel %vm669, %v1222, 0
          %v1229 = vsel %vm669, %v1224, 0
          %1231 = vmatprep.subr.bf16.mxu0 0
          %1232 = vmatpush1.bf16.xpose.msra.mxu0 0
          %1233 = vmatprep.subr.bf16.mxu0 0
          %1234 = vmatpush1.bf16.xpose.msra.mxu0 0
          %1235 = vmatprep.subr.bf16.mxu0 0
          %1236 = vmatpush1.bf16.xpose.msra.mxu0 0
          %1237 = vmatprep.subr.bf16.mxu0 0
          %1238 = vmatpush1.bf16.xpose.msra.mxu0 0
          %1239 = vmatprep.subr.bf16.mxu0 0
          %1240 = vmatpush1.bf16.xpose.msra.mxu0 0
          %1241 = vmatprep.subr.bf16.mxu0 0
          %1242 = vmatpush1.bf16.xpose.msra.mxu0 0
          %1243 = vmatprep.subr.bf16.mxu0 0
          %1244 = vmatpush1.bf16.xpose.msra.mxu0 0
          %1245 = vmatprep.subr.bf16.mxu0 0
          %1246 = vmatpush1.bf16.xpose.msra.mxu0 %v1229
          %1247 = vmatprep.subr.bf16.mxu0 0
          %1248 = vmatpush2.bf16.xpose.msra.mxu0 0
          %1249 = vmatprep.subr.bf16.mxu0 0
          %1250 = vmatpush2.bf16.xpose.msra.mxu0 0
          %1251 = vmatprep.subr.bf16.mxu0 0
          %1252 = vmatpush2.bf16.xpose.msra.mxu0 0
          %1253 = vmatprep.subr.bf16.mxu0 0
          %1254 = vmatpush2.bf16.xpose.msra.mxu0 0
          %1255 = vmatprep.subr.bf16.mxu0 0
          %1256 = vmatpush2.bf16.xpose.msra.mxu0 0
          %1257 = vmatprep.subr.bf16.mxu0 0
          %1258 = vmatpush2.bf16.xpose.msra.mxu0 0
          %1259 = vmatprep.subr.bf16.mxu0 0
          %1260 = vmatpush2.bf16.xpose.msra.mxu0 0
          %1261 = vmatprep.subr.bf16.mxu0 0
          %1262 = vmatpush2.bf16.xpose.msra.mxu0 0
          %1263 = vmatprep.mubr.bf16.mxu0 0
          %1264 = vmatmul.mubr.bf16.gmra.mxu0 %v1226
          %v1265 = vpop.f32.mrf.mxu0
          %v1266 = vadd.f32 0.0, %v1265
          %v1267 = vpop.f32.mrf.mxu0
          %v1268 = vpop.f32.mrf.mxu0
          %v1269 = vpop.f32.mrf.mxu0
          %1270 = vdwg.mxu0
          %1271 = vrot.lane.b32.xlu0 %v543, 112
          %v1272 = vpop.permute.xlu0 %1271
          %1273 = vrot.lane.b32.xlu0 %v602, 112
          %v1274 = vpop.permute.xlu0 %1273
          %v1276 = vsel %vm669, %v1272, 0
          %v1279 = vsel %vm669, %v1274, 0
          %1281 = vmatprep.subr.bf16.mxu0 0
          %1282 = vmatpush1.bf16.xpose.msra.mxu0 0
          %1283 = vmatprep.subr.bf16.mxu0 0
          %1284 = vmatpush1.bf16.xpose.msra.mxu0 0
          %1285 = vmatprep.subr.bf16.mxu0 0
          %1286 = vmatpush1.bf16.xpose.msra.mxu0 0
          %1287 = vmatprep.subr.bf16.mxu0 0
          %1288 = vmatpush1.bf16.xpose.msra.mxu0 0
          %1289 = vmatprep.subr.bf16.mxu0 0
          %1290 = vmatpush1.bf16.xpose.msra.mxu0 0
          %1291 = vmatprep.subr.bf16.mxu0 0
          %1292 = vmatpush1.bf16.xpose.msra.mxu0 0
          %1293 = vmatprep.subr.bf16.mxu0 0
          %1294 = vmatpush1.bf16.xpose.msra.mxu0 0
          %1295 = vmatprep.subr.bf16.mxu0 0
          %1296 = vmatpush1.bf16.xpose.msra.mxu0 %v1279
          %1297 = vmatprep.subr.bf16.mxu0 0
          %1298 = vmatpush2.bf16.xpose.msra.mxu0 0
          %1299 = vmatprep.subr.bf16.mxu0 0
          %1300 = vmatpush2.bf16.xpose.msra.mxu0 0
          %1301 = vmatprep.subr.bf16.mxu0 0
          %1302 = vmatpush2.bf16.xpose.msra.mxu0 0
          %1303 = vmatprep.subr.bf16.mxu0 0
          %1304 = vmatpush2.bf16.xpose.msra.mxu0 0
          %1305 = vmatprep.subr.bf16.mxu0 0
          %1306 = vmatpush2.bf16.xpose.msra.mxu0 0
          %1307 = vmatprep.subr.bf16.mxu0 0
          %1308 = vmatpush2.bf16.xpose.msra.mxu0 0
          %1309 = vmatprep.subr.bf16.mxu0 0
          %1310 = vmatpush2.bf16.xpose.msra.mxu0 0
          %1311 = vmatprep.subr.bf16.mxu0 0
          %1312 = vmatpush2.bf16.xpose.msra.mxu0 0
          %1313 = vmatprep.mubr.bf16.mxu0 0
          %1314 = vmatmul.mubr.bf16.gmra.mxu0 %v1276
          %v1315 = vpop.f32.mrf.mxu0
          %v1316 = vadd.f32 0.0, %v1315
          %v1317 = vpop.f32.mrf.mxu0
          %v1318 = vpop.f32.mrf.mxu0
          %v1319 = vpop.f32.mrf.mxu0
          %1320 = vdwg.mxu0
          %v1321 = vsel %vm763, -inf, %v1266
          %v1322 = vsel %vm763, -inf, %v1316
          %v1323 = vsel %vm669, %v1321, -inf
          %1324 = vmax.xlane.f32.xlu0 %v1323
          %v1325 = vpop.xlane.xlu0 %1324
          %v1326 = vsel %vm669, %v1322, -inf
          %1327 = vmax.xlane.f32.xlu0 %v1326
          %v1328 = vpop.xlane.xlu0 %1327
          %v1329 = vsub.f32 %v1321, %v1325
          %v1330 = vsub.f32 %v1322, %v1328
          %v1331 = vpack.c.bf16 %v1329, %v1329
          %v1332 = vpack.c.bf16 %v1330, %v1330
          %v1334 = vmul.bf16 %v1331, 1069105081
          %v1335 = vpow.bf16.pop %v1334
          %v1337 = vmul.bf16 %v1332, 1069105081
          %v1338 = vpow.bf16.pop %v1337
          %v1339 = vunpack.c.l.bf16 %v1335
          %v1340 = vunpack.c.l.bf16 %v1338
          %v1341 = vsel %vm669, %v1339, 0.0
          %1342 = vadd.xlane.f32.xlu0 %v1341
          %v1343 = vpop.xlane.xlu0 %1342
          %v1344 = vsel %vm669, %v1340, 0.0
          %1345 = vadd.xlane.f32.xlu0 %v1344
          %v1346 = vpop.xlane.xlu0 %1345
          %v1347 = vrcp.pop %v1343
          %v1348 = vrcp.pop %v1346
          %v1349 = vpack.c.bf16 %v1347, %v1347
          %v1350 = vpack.c.bf16 %v1348, %v1348
          %v1351 = vmul.bf16 %v1335, %v1349
          %v1352 = vmul.bf16 %v1338, %v1350
          %1353 = vrot.lane.b32.xlu0 %v660, 112
          %v1354 = vpop.permute.xlu0 %1353
          %v1356 = vsel %vm669, %v1351, 0
          %v1359 = vsel %vm799, %v1354, 0
          %1361 = vmatprep.subr.bf16.mxu0 0
          %1362 = vmatpush1.bf16.msra.mxu0 0
          %1363 = vmatprep.subr.bf16.mxu0 0
          %1364 = vmatpush1.bf16.msra.mxu0 0
          %1365 = vmatprep.subr.bf16.mxu0 0
          %1366 = vmatpush1.bf16.msra.mxu0 0
          %1367 = vmatprep.subr.bf16.mxu0 0
          %1368 = vmatpush1.bf16.msra.mxu0 0
          %1369 = vmatprep.subr.bf16.mxu0 0
          %1370 = vmatpush1.bf16.msra.mxu0 0
          %1371 = vmatprep.subr.bf16.mxu0 0
          %1372 = vmatpush1.bf16.msra.mxu0 0
          %1373 = vmatprep.subr.bf16.mxu0 0
          %1374 = vmatpush1.bf16.msra.mxu0 0
          %1375 = vmatprep.subr.bf16.mxu0 0
          %1376 = vmatpush1.bf16.msra.mxu0 %v1359
          %1377 = vmatprep.subr.bf16.mxu0 0
          %1378 = vmatpush2.bf16.msra.mxu0 0
          %1379 = vmatprep.subr.bf16.mxu0 0
          %1380 = vmatpush2.bf16.msra.mxu0 0
          %1381 = vmatprep.subr.bf16.mxu0 0
          %1382 = vmatpush2.bf16.msra.mxu0 0
          %1383 = vmatprep.subr.bf16.mxu0 0
          %1384 = vmatpush2.bf16.msra.mxu0 0
          %1385 = vmatprep.subr.bf16.mxu0 0
          %1386 = vmatpush2.bf16.msra.mxu0 0
          %1387 = vmatprep.subr.bf16.mxu0 0
          %1388 = vmatpush2.bf16.msra.mxu0 0
          %1389 = vmatprep.subr.bf16.mxu0 0
          %1390 = vmatpush2.bf16.msra.mxu0 0
          %1391 = vmatprep.subr.bf16.mxu0 0
          %1392 = vmatpush2.bf16.msra.mxu0 0
          %1393 = vmatprep.mubr.bf16.mxu0 0
          %1394 = vmatmul.mubr.bf16.gmra.mxu0 %v1356
          %v1395 = vpop.f32.mrf.mxu0
          %v1396 = vadd.f32 0.0, %v1395
          %v1397 = vpop.f32.mrf.mxu0
          %v1398 = vpop.f32.mrf.mxu0
          %v1399 = vpop.f32.mrf.mxu0
          %1400 = vdwg.mxu0
          %1401 = vrot.lane.b32.xlu0 %v661, 112
          %v1402 = vpop.permute.xlu0 %1401
          %v1404 = vsel %vm669, %v1352, 0
          %v1407 = vsel %vm799, %v1402, 0
          %1409 = vmatprep.subr.bf16.mxu0 0
          %1410 = vmatpush1.bf16.msra.mxu0 0
          %1411 = vmatprep.subr.bf16.mxu0 0
          %1412 = vmatpush1.bf16.msra.mxu0 0
          %1413 = vmatprep.subr.bf16.mxu0 0
          %1414 = vmatpush1.bf16.msra.mxu0 0
          %1415 = vmatprep.subr.bf16.mxu0 0
          %1416 = vmatpush1.bf16.msra.mxu0 0
          %1417 = vmatprep.subr.bf16.mxu0 0
          %1418 = vmatpush1.bf16.msra.mxu0 0
          %1419 = vmatprep.subr.bf16.mxu0 0
          %1420 = vmatpush1.bf16.msra.mxu0 0
          %1421 = vmatprep.subr.bf16.mxu0 0
          %1422 = vmatpush1.bf16.msra.mxu0 0
          %1423 = vmatprep.subr.bf16.mxu0 0
          %1424 = vmatpush1.bf16.msra.mxu0 %v1407
          %1425 = vmatprep.subr.bf16.mxu0 0
          %1426 = vmatpush2.bf16.msra.mxu0 0
          %1427 = vmatprep.subr.bf16.mxu0 0
          %1428 = vmatpush2.bf16.msra.mxu0 0
          %1429 = vmatprep.subr.bf16.mxu0 0
          %1430 = vmatpush2.bf16.msra.mxu0 0
          %1431 = vmatprep.subr.bf16.mxu0 0
          %1432 = vmatpush2.bf16.msra.mxu0 0
          %1433 = vmatprep.subr.bf16.mxu0 0
          %1434 = vmatpush2.bf16.msra.mxu0 0
          %1435 = vmatprep.subr.bf16.mxu0 0
          %1436 = vmatpush2.bf16.msra.mxu0 0
          %1437 = vmatprep.subr.bf16.mxu0 0
          %1438 = vmatpush2.bf16.msra.mxu0 0
          %1439 = vmatprep.subr.bf16.mxu0 0
          %1440 = vmatpush2.bf16.msra.mxu0 0
          %1441 = vmatprep.mubr.bf16.mxu0 0
          %1442 = vmatmul.mubr.bf16.gmra.mxu0 %v1404
          %v1443 = vpop.f32.mrf.mxu0
          %v1444 = vadd.f32 0.0, %v1443
          %v1445 = vpop.f32.mrf.mxu0
          %v1446 = vpop.f32.mrf.mxu0
          %v1447 = vpop.f32.mrf.mxu0
          %1448 = vdwg.mxu0
          %v1449 = vpack.c.bf16 %v1444, %v1396
          %v1450 = vld [vmem:[%s4 + $0x8] sm:$0xf]
          %v1452 = vsel %vm669, %v1449, 0
          %v1455 = vsel %vm799, %v1450, 0
          %1457 = vmatprep.subr.bf16.mxu0 0
          %1458 = vmatpush1.bf16.msra.mxu0 0
          %1459 = vmatprep.subr.bf16.mxu0 0
          %1460 = vmatpush1.bf16.msra.mxu0 0
          %1461 = vmatprep.subr.bf16.mxu0 0
          %1462 = vmatpush1.bf16.msra.mxu0 0
          %1463 = vmatprep.subr.bf16.mxu0 0
          %1464 = vmatpush1.bf16.msra.mxu0 0
          %1465 = vmatprep.subr.bf16.mxu0 0
          %1466 = vmatpush1.bf16.msra.mxu0 0
          %1467 = vmatprep.subr.bf16.mxu0 0
          %1468 = vmatpush1.bf16.msra.mxu0 0
          %1469 = vmatprep.subr.bf16.mxu0 0
          %1470 = vmatpush1.bf16.msra.mxu0 0
          %1471 = vmatprep.subr.bf16.mxu0 0
          %1472 = vmatpush1.bf16.msra.mxu0 %v1455
          %1473 = vmatprep.subr.bf16.mxu0 0
          %1474 = vmatpush2.bf16.msra.mxu0 0
          %1475 = vmatprep.subr.bf16.mxu0 0
          %1476 = vmatpush2.bf16.msra.mxu0 0
          %1477 = vmatprep.subr.bf16.mxu0 0
          %1478 = vmatpush2.bf16.msra.mxu0 0
          %1479 = vmatprep.subr.bf16.mxu0 0
          %1480 = vmatpush2.bf16.msra.mxu0 0
          %1481 = vmatprep.subr.bf16.mxu0 0
          %1482 = vmatpush2.bf16.msra.mxu0 0
          %1483 = vmatprep.subr.bf16.mxu0 0
          %1484 = vmatpush2.bf16.msra.mxu0 0
          %1485 = vmatprep.subr.bf16.mxu0 0
          %1486 = vmatpush2.bf16.msra.mxu0 0
          %1487 = vmatprep.subr.bf16.mxu0 0
          %1488 = vmatpush2.bf16.msra.mxu0 0
          %1489 = vmatprep.mubr.bf16.mxu0 0
          %1490 = vmatmul.mubr.bf16.gmra.mxu0 %v1452
          %v1491 = vpop.f32.mrf.mxu0
          %v1492 = vadd.f32 0.0, %v1491
          %v1493 = vpop.f32.mrf.mxu0
          %v1494 = vpop.f32.mrf.mxu0
          %v1495 = vadd.f32 0.0, %v1494
          %v1496 = vpop.f32.mrf.mxu0
          %1497 = vdwg.mxu0
          %v1498 = vadd.f32 %v1215, %v1492
          %v1499 = vadd.f32 %v1218, %v1495
          %1500 = vrot.lane.b32.xlu0 %v542, 104
          %v1501 = vpop.permute.xlu0 %1500
          %1502 = vrot.lane.b32.xlu0 %v601, 104
          %v1503 = vpop.permute.xlu0 %1502
          %v1505 = vsel %vm669, %v1501, 0
          %v1508 = vsel %vm669, %v1503, 0
          %1510 = vmatprep.subr.bf16.mxu0 0
          %1511 = vmatpush1.bf16.xpose.msra.mxu0 0
          %1512 = vmatprep.subr.bf16.mxu0 0
          %1513 = vmatpush1.bf16.xpose.msra.mxu0 0
          %1514 = vmatprep.subr.bf16.mxu0 0
          %1515 = vmatpush1.bf16.xpose.msra.mxu0 0
          %1516 = vmatprep.subr.bf16.mxu0 0
          %1517 = vmatpush1.bf16.xpose.msra.mxu0 0
          %1518 = vmatprep.subr.bf16.mxu0 0
          %1519 = vmatpush1.bf16.xpose.msra.mxu0 0
          %1520 = vmatprep.subr.bf16.mxu0 0
          %1521 = vmatpush1.bf16.xpose.msra.mxu0 0
          %1522 = vmatprep.subr.bf16.mxu0 0
          %1523 = vmatpush1.bf16.xpose.msra.mxu0 0
          %1524 = vmatprep.subr.bf16.mxu0 0
          %1525 = vmatpush1.bf16.xpose.msra.mxu0 %v1508
          %1526 = vmatprep.subr.bf16.mxu0 0
          %1527 = vmatpush2.bf16.xpose.msra.mxu0 0
          %1528 = vmatprep.subr.bf16.mxu0 0
          %1529 = vmatpush2.bf16.xpose.msra.mxu0 0
          %1530 = vmatprep.subr.bf16.mxu0 0
          %1531 = vmatpush2.bf16.xpose.msra.mxu0 0
          %1532 = vmatprep.subr.bf16.mxu0 0
          %1533 = vmatpush2.bf16.xpose.msra.mxu0 0
          %1534 = vmatprep.subr.bf16.mxu0 0
          %1535 = vmatpush2.bf16.xpose.msra.mxu0 0
          %1536 = vmatprep.subr.bf16.mxu0 0
          %1537 = vmatpush2.bf16.xpose.msra.mxu0 0
          %1538 = vmatprep.subr.bf16.mxu0 0
          %1539 = vmatpush2.bf16.xpose.msra.mxu0 0
          %1540 = vmatprep.subr.bf16.mxu0 0
          %1541 = vmatpush2.bf16.xpose.msra.mxu0 0
          %1542 = vmatprep.mubr.bf16.mxu0 0
          %1543 = vmatmul.mubr.bf16.gmra.mxu0 %v1505
          %v1544 = vpop.f32.mrf.mxu0
          %v1545 = vadd.f32 0.0, %v1544
          %v1546 = vpop.f32.mrf.mxu0
          %v1547 = vpop.f32.mrf.mxu0
          %v1548 = vpop.f32.mrf.mxu0
          %1549 = vdwg.mxu0
          %1550 = vrot.lane.b32.xlu0 %v543, 104
          %v1551 = vpop.permute.xlu0 %1550
          %1552 = vrot.lane.b32.xlu0 %v602, 104
          %v1553 = vpop.permute.xlu0 %1552
          %v1555 = vsel %vm669, %v1551, 0
          %v1558 = vsel %vm669, %v1553, 0
          %1560 = vmatprep.subr.bf16.mxu0 0
          %1561 = vmatpush1.bf16.xpose.msra.mxu0 0
          %1562 = vmatprep.subr.bf16.mxu0 0
          %1563 = vmatpush1.bf16.xpose.msra.mxu0 0
          %1564 = vmatprep.subr.bf16.mxu0 0
          %1565 = vmatpush1.bf16.xpose.msra.mxu0 0
          %1566 = vmatprep.subr.bf16.mxu0 0
          %1567 = vmatpush1.bf16.xpose.msra.mxu0 0
          %1568 = vmatprep.subr.bf16.mxu0 0
          %1569 = vmatpush1.bf16.xpose.msra.mxu0 0
          %1570 = vmatprep.subr.bf16.mxu0 0
          %1571 = vmatpush1.bf16.xpose.msra.mxu0 0
          %1572 = vmatprep.subr.bf16.mxu0 0
          %1573 = vmatpush1.bf16.xpose.msra.mxu0 0
          %1574 = vmatprep.subr.bf16.mxu0 0
          %1575 = vmatpush1.bf16.xpose.msra.mxu0 %v1558
          %1576 = vmatprep.subr.bf16.mxu0 0
          %1577 = vmatpush2.bf16.xpose.msra.mxu0 0
          %1578 = vmatprep.subr.bf16.mxu0 0
          %1579 = vmatpush2.bf16.xpose.msra.mxu0 0
          %1580 = vmatprep.subr.bf16.mxu0 0
          %1581 = vmatpush2.bf16.xpose.msra.mxu0 0
          %1582 = vmatprep.subr.bf16.mxu0 0
          %1583 = vmatpush2.bf16.xpose.msra.mxu0 0
          %1584 = vmatprep.subr.bf16.mxu0 0
          %1585 = vmatpush2.bf16.xpose.msra.mxu0 0
          %1586 = vmatprep.subr.bf16.mxu0 0
          %1587 = vmatpush2.bf16.xpose.msra.mxu0 0
          %1588 = vmatprep.subr.bf16.mxu0 0
          %1589 = vmatpush2.bf16.xpose.msra.mxu0 0
          %1590 = vmatprep.subr.bf16.mxu0 0
          %1591 = vmatpush2.bf16.xpose.msra.mxu0 0
          %1592 = vmatprep.mubr.bf16.mxu0 0
          %1593 = vmatmul.mubr.bf16.gmra.mxu0 %v1555
          %v1594 = vpop.f32.mrf.mxu0
          %v1595 = vadd.f32 0.0, %v1594
          %v1596 = vpop.f32.mrf.mxu0
          %v1597 = vpop.f32.mrf.mxu0
          %v1598 = vpop.f32.mrf.mxu0
          %1599 = vdwg.mxu0
          %v1600 = vsel %vm763, -inf, %v1545
          %v1601 = vsel %vm763, -inf, %v1595
          %v1602 = vsel %vm669, %v1600, -inf
          %1603 = vmax.xlane.f32.xlu0 %v1602
          %v1604 = vpop.xlane.xlu0 %1603
          %v1605 = vsel %vm669, %v1601, -inf
          %1606 = vmax.xlane.f32.xlu0 %v1605
          %v1607 = vpop.xlane.xlu0 %1606
          %v1608 = vsub.f32 %v1600, %v1604
          %v1609 = vsub.f32 %v1601, %v1607
          %v1610 = vpack.c.bf16 %v1608, %v1608
          %v1611 = vpack.c.bf16 %v1609, %v1609
          %v1613 = vmul.bf16 %v1610, 1069105081
          %v1614 = vpow.bf16.pop %v1613
          %v1616 = vmul.bf16 %v1611, 1069105081
          %v1617 = vpow.bf16.pop %v1616
          %v1618 = vunpack.c.l.bf16 %v1614
          %v1619 = vunpack.c.l.bf16 %v1617
          %v1620 = vsel %vm669, %v1618, 0.0
          %1621 = vadd.xlane.f32.xlu0 %v1620
          %v1622 = vpop.xlane.xlu0 %1621
          %v1623 = vsel %vm669, %v1619, 0.0
          %1624 = vadd.xlane.f32.xlu0 %v1623
          %v1625 = vpop.xlane.xlu0 %1624
          %v1626 = vrcp.pop %v1622
          %v1627 = vrcp.pop %v1625
          %v1628 = vpack.c.bf16 %v1626, %v1626
          %v1629 = vpack.c.bf16 %v1627, %v1627
          %v1630 = vmul.bf16 %v1614, %v1628
          %v1631 = vmul.bf16 %v1617, %v1629
          %1632 = vrot.lane.b32.xlu0 %v660, 104
          %v1633 = vpop.permute.xlu0 %1632
          %v1635 = vsel %vm669, %v1630, 0
          %v1638 = vsel %vm799, %v1633, 0
          %1640 = vmatprep.subr.bf16.mxu0 0
          %1641 = vmatpush1.bf16.msra.mxu0 0
          %1642 = vmatprep.subr.bf16.mxu0 0
          %1643 = vmatpush1.bf16.msra.mxu0 0
          %1644 = vmatprep.subr.bf16.mxu0 0
          %1645 = vmatpush1.bf16.msra.mxu0 0
          %1646 = vmatprep.subr.bf16.mxu0 0
          %1647 = vmatpush1.bf16.msra.mxu0 0
          %1648 = vmatprep.subr.bf16.mxu0 0
          %1649 = vmatpush1.bf16.msra.mxu0 0
          %1650 = vmatprep.subr.bf16.mxu0 0
          %1651 = vmatpush1.bf16.msra.mxu0 0
          %1652 = vmatprep.subr.bf16.mxu0 0
          %1653 = vmatpush1.bf16.msra.mxu0 0
          %1654 = vmatprep.subr.bf16.mxu0 0
          %1655 = vmatpush1.bf16.msra.mxu0 %v1638
          %1656 = vmatprep.subr.bf16.mxu0 0
          %1657 = vmatpush2.bf16.msra.mxu0 0
          %1658 = vmatprep.subr.bf16.mxu0 0
          %1659 = vmatpush2.bf16.msra.mxu0 0
          %1660 = vmatprep.subr.bf16.mxu0 0
          %1661 = vmatpush2.bf16.msra.mxu0 0
          %1662 = vmatprep.subr.bf16.mxu0 0
          %1663 = vmatpush2.bf16.msra.mxu0 0
          %1664 = vmatprep.subr.bf16.mxu0 0
          %1665 = vmatpush2.bf16.msra.mxu0 0
          %1666 = vmatprep.subr.bf16.mxu0 0
          %1667 = vmatpush2.bf16.msra.mxu0 0
          %1668 = vmatprep.subr.bf16.mxu0 0
          %1669 = vmatpush2.bf16.msra.mxu0 0
          %1670 = vmatprep.subr.bf16.mxu0 0
          %1671 = vmatpush2.bf16.msra.mxu0 0
          %1672 = vmatprep.mubr.bf16.mxu0 0
          %1673 = vmatmul.mubr.bf16.gmra.mxu0 %v1635
          %v1674 = vpop.f32.mrf.mxu0
          %v1675 = vadd.f32 0.0, %v1674
          %v1676 = vpop.f32.mrf.mxu0
          %v1677 = vpop.f32.mrf.mxu0
          %v1678 = vpop.f32.mrf.mxu0
          %1679 = vdwg.mxu0
          %1680 = vrot.lane.b32.xlu0 %v661, 104
          %v1681 = vpop.permute.xlu0 %1680
          %v1683 = vsel %vm669, %v1631, 0
          %v1686 = vsel %vm799, %v1681, 0
          %1688 = vmatprep.subr.bf16.mxu0 0
          %1689 = vmatpush1.bf16.msra.mxu0 0
          %1690 = vmatprep.subr.bf16.mxu0 0
          %1691 = vmatpush1.bf16.msra.mxu0 0
          %1692 = vmatprep.subr.bf16.mxu0 0
          %1693 = vmatpush1.bf16.msra.mxu0 0
          %1694 = vmatprep.subr.bf16.mxu0 0
          %1695 = vmatpush1.bf16.msra.mxu0 0
          %1696 = vmatprep.subr.bf16.mxu0 0
          %1697 = vmatpush1.bf16.msra.mxu0 0
          %1698 = vmatprep.subr.bf16.mxu0 0
          %1699 = vmatpush1.bf16.msra.mxu0 0
          %1700 = vmatprep.subr.bf16.mxu0 0
          %1701 = vmatpush1.bf16.msra.mxu0 0
          %1702 = vmatprep.subr.bf16.mxu0 0
          %1703 = vmatpush1.bf16.msra.mxu0 %v1686
          %1704 = vmatprep.subr.bf16.mxu0 0
          %1705 = vmatpush2.bf16.msra.mxu0 0
          %1706 = vmatprep.subr.bf16.mxu0 0
          %1707 = vmatpush2.bf16.msra.mxu0 0
          %1708 = vmatprep.subr.bf16.mxu0 0
          %1709 = vmatpush2.bf16.msra.mxu0 0
          %1710 = vmatprep.subr.bf16.mxu0 0
          %1711 = vmatpush2.bf16.msra.mxu0 0
          %1712 = vmatprep.subr.bf16.mxu0 0
          %1713 = vmatpush2.bf16.msra.mxu0 0
          %1714 = vmatprep.subr.bf16.mxu0 0
          %1715 = vmatpush2.bf16.msra.mxu0 0
          %1716 = vmatprep.subr.bf16.mxu0 0
          %1717 = vmatpush2.bf16.msra.mxu0 0
          %1718 = vmatprep.subr.bf16.mxu0 0
          %1719 = vmatpush2.bf16.msra.mxu0 0
          %1720 = vmatprep.mubr.bf16.mxu0 0
          %1721 = vmatmul.mubr.bf16.gmra.mxu0 %v1683
          %v1722 = vpop.f32.mrf.mxu0
          %v1723 = vadd.f32 0.0, %v1722
          %v1724 = vpop.f32.mrf.mxu0
          %v1725 = vpop.f32.mrf.mxu0
          %v1726 = vpop.f32.mrf.mxu0
          %1727 = vdwg.mxu0
          %v1728 = vpack.c.bf16 %v1723, %v1675
          %v1729 = vld [vmem:[%s4 + $0xc] sm:$0xf]
          %v1731 = vsel %vm669, %v1728, 0
          %v1734 = vsel %vm799, %v1729, 0
          %1736 = vmatprep.subr.bf16.mxu0 0
          %1737 = vmatpush1.bf16.msra.mxu0 0
          %1738 = vmatprep.subr.bf16.mxu0 0
          %1739 = vmatpush1.bf16.msra.mxu0 0
          %1740 = vmatprep.subr.bf16.mxu0 0
          %1741 = vmatpush1.bf16.msra.mxu0 0
          %1742 = vmatprep.subr.bf16.mxu0 0
          %1743 = vmatpush1.bf16.msra.mxu0 0
          %1744 = vmatprep.subr.bf16.mxu0 0
          %1745 = vmatpush1.bf16.msra.mxu0 0
          %1746 = vmatprep.subr.bf16.mxu0 0
          %1747 = vmatpush1.bf16.msra.mxu0 0
          %1748 = vmatprep.subr.bf16.mxu0 0
          %1749 = vmatpush1.bf16.msra.mxu0 0
          %1750 = vmatprep.subr.bf16.mxu0 0
          %1751 = vmatpush1.bf16.msra.mxu0 %v1734
          %1752 = vmatprep.subr.bf16.mxu0 0
          %1753 = vmatpush2.bf16.msra.mxu0 0
          %1754 = vmatprep.subr.bf16.mxu0 0
          %1755 = vmatpush2.bf16.msra.mxu0 0
          %1756 = vmatprep.subr.bf16.mxu0 0
          %1757 = vmatpush2.bf16.msra.mxu0 0
          %1758 = vmatprep.subr.bf16.mxu0 0
          %1759 = vmatpush2.bf16.msra.mxu0 0
          %1760 = vmatprep.subr.bf16.mxu0 0
          %1761 = vmatpush2.bf16.msra.mxu0 0
          %1762 = vmatprep.subr.bf16.mxu0 0
          %1763 = vmatpush2.bf16.msra.mxu0 0
          %1764 = vmatprep.subr.bf16.mxu0 0
          %1765 = vmatpush2.bf16.msra.mxu0 0
          %1766 = vmatprep.subr.bf16.mxu0 0
          %1767 = vmatpush2.bf16.msra.mxu0 0
          %1768 = vmatprep.mubr.bf16.mxu0 0
          %1769 = vmatmul.mubr.bf16.gmra.mxu0 %v1731
          %v1770 = vpop.f32.mrf.mxu0
          %v1771 = vadd.f32 0.0, %v1770
          %v1772 = vpop.f32.mrf.mxu0
          %v1773 = vpop.f32.mrf.mxu0
          %v1774 = vadd.f32 0.0, %v1773
          %v1775 = vpop.f32.mrf.mxu0
          %1776 = vdwg.mxu0
          %v1777 = vadd.f32 %v1498, %v1771
          %v1778 = vadd.f32 %v1499, %v1774
          %v1779 = vld [vmem:[#allocation2] sm:$0xff]
          %v1780 = vld [vmem:[#allocation2 + $0x8] sm:$0xff]
          %v1781 = vadd.f32 %v1779, %v1777
          %v1782 = vadd.f32 %v1780, %v1778
          %1783 = vst.msk [vmem:[#allocation2] sm:$0xff] %vm457, %v1781
          %1784 = vst.msk [vmem:[#allocation2 + $0x8] sm:$0xff] %vm457, %v1782
          %v1785 = vld [vmem:[#allocation2] sm:$0xff]
          %v1786 = vld [vmem:[#allocation2 + $0x8] sm:$0xff]
          %v1787 = vld [vmem:[%s6] sm:$0x1]
          %v1788 = vmul.f32 %v1785, %v1785
          %v1789 = vmul.f32 %v1786, %v1786
          %v1790 = vsel %vm457, %v1788, 0.0
          %1791 = vadd.xlane.f32.xlu0 %v1790
          %v1792 = vpop.xlane.xlu0 %1791
          %v1793 = vsel %vm457, %v1789, 0.0
          %1794 = vadd.xlane.f32.xlu0 %v1793
          %v1795 = vpop.xlane.xlu0 %1794
          %v1796 = vmul.f32 %v1792, %v464
          %v1797 = vmul.f32 %v1795, %v464
          %v1798 = vadd.f32 %v1796, 1e-05
          %v1799 = vadd.f32 %v1797, 1e-05
          %v1800 = vrsqrt.pop %v1798
          %v1801 = vrsqrt.pop %v1799
          %v1802 = vmul.f32 %v1785, %v1800
          %v1803 = vmul.f32 %v1786, %v1801
          %v1805 = vlaneseq
          %v1806 = vshrl.u32 %v1805, 7
          %v1807 = vsub.s32 0, %v1806
          %v1808 = vrot.slane %v1787, %v1807
          %v1810 = vmul.f32 %v1802, %v1808
          %v1811 = vmul.f32 %v1803, %v1808
          %v1812 = vpack.c.bf16 %v1810, %v1810
          %v1813 = vpack.c.bf16 %v1811, %v1811
          %vm1814 = vcmask 257024
          %1815 = vst.msk [vmem:[#allocation3] sm:$0xf] %vm1814, %v1812
          %1816 = vst.msk [vmem:[#allocation3 + $0x4] sm:$0xf] %vm1814, %v1813
        $region101: #{transformer_lm.3} parent=92 // pred_fallthru
          _
        %v1817 = vld [vmem:[#allocation3] sm:$0xf]
        %v1818 = vld [vmem:[#allocation3 + $0x4] sm:$0xf]
        %v1819 = vld [vmem:[%s384] sm:$0xf]
        %v1820 = vld [vmem:[%s384 + $0x4] sm:$0xf]
        %v1821 = vld [vmem:[%s384 + $0x8] sm:$0xf]
        %v1822 = vld [vmem:[%s384 + $0xc] sm:$0xf]
        %v1825 = vunpack.c.l.b16 %v1817
        %v1826 = vunpack.c.l.b16 %v1818
        %v1827 = vpack.c.b16 %v1826, %v1825
        %v1832 = vunpack.c.l.b16 %v1819
        %v1833 = vunpack.c.l.b16 %v1820
        %v1834 = vunpack.c.l.b16 %v1821
        %v1835 = vunpack.c.l.b16 %v1822
        %v1836 = vpack.c.b16 %v1833, %v1832
        %v1837 = vpack.c.b16 %v1835, %v1834
        %vm1840 = vcmask 261120
        %v1842 = vsel %vm1840, %v1827, 0
        %1844 = vmatprep.subr.bf16.mxu0 0
        %1845 = vmatpush1.bf16.msra.mxu0 0
        %1846 = vmatprep.subr.bf16.mxu0 0
        %1847 = vmatpush1.bf16.msra.mxu0 0
        %1848 = vmatprep.subr.bf16.mxu0 0
        %1849 = vmatpush1.bf16.msra.mxu0 0
        %1850 = vmatprep.subr.bf16.mxu0 0
        %1851 = vmatpush1.bf16.msra.mxu0 0
        %1852 = vmatprep.subr.bf16.mxu0 0
        %1853 = vmatpush1.bf16.msra.mxu0 0
        %1854 = vmatprep.subr.bf16.mxu0 0
        %1855 = vmatpush1.bf16.msra.mxu0 0
        %1856 = vmatprep.subr.bf16.mxu0 0
        %1857 = vmatpush1.bf16.msra.mxu0 %v1837
        %1858 = vmatprep.subr.bf16.mxu0 0
        %1859 = vmatpush1.bf16.msra.mxu0 %v1836
        %1860 = vmatprep.subr.bf16.mxu0 0
        %1861 = vmatpush2.bf16.msra.mxu0 0
        %1862 = vmatprep.subr.bf16.mxu0 0
        %1863 = vmatpush2.bf16.msra.mxu0 0
        %1864 = vmatprep.subr.bf16.mxu0 0
        %1865 = vmatpush2.bf16.msra.mxu0 0
        %1866 = vmatprep.subr.bf16.mxu0 0
        %1867 = vmatpush2.bf16.msra.mxu0 0
        %1868 = vmatprep.subr.bf16.mxu0 0
        %1869 = vmatpush2.bf16.msra.mxu0 0
        %1870 = vmatprep.subr.bf16.mxu0 0
        %1871 = vmatpush2.bf16.msra.mxu0 0
        %1872 = vmatprep.subr.bf16.mxu0 0
        %1873 = vmatpush2.bf16.msra.mxu0 0
        %1874 = vmatprep.subr.bf16.mxu0 0
        %1875 = vmatpush2.bf16.msra.mxu0 0
        %1876 = vmatprep.mubr.bf16.mxu0 0
        %1877 = vmatmul.mubr.bf16.gmra.mxu0 %v1842
        %v1878 = vpop.f32.mrf.mxu0
        %v1879 = vadd.f32 0.0, %v1878
        %v1880 = vpop.f32.mrf.mxu0
        %v1881 = vpop.f32.mrf.mxu0
        %v1882 = vadd.f32 0.0, %v1881
        %v1883 = vpop.f32.mrf.mxu0
        %1884 = vdwg.mxu0
        %v1885 = vmul.f32 %v1879, 0.5
        %v1886 = vmul.f32 %v1882, 0.5
        %v1887 = vmul.f32 %v1879, 0.70710677
        %v1888 = vmul.f32 %v1882, 0.70710677
        %v1889 = verf.f32.pop %v1887
        %v1890 = verf.f32.pop %v1888
        %v1891 = vadd.f32 %v1889, 1.0
        %v1892 = vadd.f32 %v1890, 1.0
        %v1893 = vmul.f32 %v1885, %v1891
        %v1894 = vmul.f32 %v1886, %v1892
        %v1895 = vpack.c.bf16 %v1894, %v1893
        %v1896 = vld [vmem:[%s437] sm:$0xf]
        %v1897 = vld [vmem:[%s437 + $0x4] sm:$0xf]
        %v1898 = vld [vmem:[%s437 + $0x8] sm:$0xf]
        %v1899 = vld [vmem:[%s437 + $0xc] sm:$0xf]
        %v1900 = vld [vmem:[%s437 + $0x10] sm:$0xf]
        %v1901 = vld [vmem:[%s437 + $0x14] sm:$0xf]
        %v1902 = vld [vmem:[%s437 + $0x18] sm:$0xf]
        %v1903 = vld [vmem:[%s437 + $0x1c] sm:$0xf]
        %v1904 = vld [vmem:[%s437 + $0x20] sm:$0xf]
        %v1905 = vld [vmem:[%s437 + $0x24] sm:$0xf]
        %v1906 = vld [vmem:[%s437 + $0x28] sm:$0xf]
        %v1907 = vld [vmem:[%s437 + $0x2c] sm:$0xf]
        %v1908 = vld [vmem:[%s437 + $0x30] sm:$0xf]
        %v1909 = vld [vmem:[%s437 + $0x34] sm:$0xf]
        %v1910 = vld [vmem:[%s437 + $0x38] sm:$0xf]
        %v1911 = vld [vmem:[%s437 + $0x3c] sm:$0xf]
        %v1928 = vunpack.c.l.b16 %v1896
        %v1929 = vunpack.c.l.b16 %v1897
        %v1930 = vunpack.c.l.b16 %v1898
        %v1931 = vunpack.c.l.b16 %v1899
        %v1932 = vunpack.c.l.b16 %v1900
        %v1933 = vunpack.c.l.b16 %v1901
        %v1934 = vunpack.c.l.b16 %v1902
        %v1935 = vunpack.c.l.b16 %v1903
        %v1936 = vunpack.c.l.b16 %v1904
        %v1937 = vunpack.c.l.b16 %v1905
        %v1938 = vunpack.c.l.b16 %v1906
        %v1939 = vunpack.c.l.b16 %v1907
        %v1940 = vunpack.c.l.b16 %v1908
        %v1941 = vunpack.c.l.b16 %v1909
        %v1942 = vunpack.c.l.b16 %v1910
        %v1943 = vunpack.c.l.b16 %v1911
        %v1944 = vpack.c.b16 %v1929, %v1928
        %v1945 = vpack.c.b16 %v1931, %v1930
        %v1946 = vpack.c.b16 %v1933, %v1932
        %v1947 = vpack.c.b16 %v1935, %v1934
        %v1948 = vpack.c.b16 %v1937, %v1936
        %v1949 = vpack.c.b16 %v1939, %v1938
        %v1950 = vpack.c.b16 %v1941, %v1940
        %v1951 = vpack.c.b16 %v1943, %v1942
        %1960 = vmatprep.subr.bf16.mxu0 0
        %1961 = vmatpush1.bf16.msra.mxu0 %v1951
        %1962 = vmatprep.subr.bf16.mxu0 0
        %1963 = vmatpush1.bf16.msra.mxu0 %v1950
        %1964 = vmatprep.subr.bf16.mxu0 0
        %1965 = vmatpush1.bf16.msra.mxu0 %v1949
        %1966 = vmatprep.subr.bf16.mxu0 0
        %1967 = vmatpush1.bf16.msra.mxu0 %v1948
        %1968 = vmatprep.subr.bf16.mxu0 0
        %1969 = vmatpush1.bf16.msra.mxu0 %v1947
        %1970 = vmatprep.subr.bf16.mxu0 0
        %1971 = vmatpush1.bf16.msra.mxu0 %v1946
        %1972 = vmatprep.subr.bf16.mxu0 0
        %1973 = vmatpush1.bf16.msra.mxu0 %v1945
        %1974 = vmatprep.subr.bf16.mxu0 0
        %1975 = vmatpush1.bf16.msra.mxu0 %v1944
        %1976 = vmatprep.subr.bf16.mxu0 0
        %1977 = vmatpush2.bf16.msra.mxu0 0
        %1978 = vmatprep.subr.bf16.mxu0 0
        %1979 = vmatpush2.bf16.msra.mxu0 0
        %1980 = vmatprep.subr.bf16.mxu0 0
        %1981 = vmatpush2.bf16.msra.mxu0 0
        %1982 = vmatprep.subr.bf16.mxu0 0
        %1983 = vmatpush2.bf16.msra.mxu0 0
        %1984 = vmatprep.subr.bf16.mxu0 0
        %1985 = vmatpush2.bf16.msra.mxu0 0
        %1986 = vmatprep.subr.bf16.mxu0 0
        %1987 = vmatpush2.bf16.msra.mxu0 0
        %1988 = vmatprep.subr.bf16.mxu0 0
        %1989 = vmatpush2.bf16.msra.mxu0 0
        %1990 = vmatprep.subr.bf16.mxu0 0
        %1991 = vmatpush2.bf16.msra.mxu0 0
        %1992 = vmatprep.mubr.bf16.mxu0 0
        %1993 = vmatmul.mubr.bf16.gmra.mxu0 %v1895
        %v1994 = vpop.f32.mrf.mxu0
        %v1995 = vadd.f32 0.0, %v1994
        %v1996 = vpop.f32.mrf.mxu0
        %v1997 = vpop.f32.mrf.mxu0
        %v1998 = vadd.f32 0.0, %v1997
        %v1999 = vpop.f32.mrf.mxu0
        %2000 = vdwg.mxu0
        %v2001 = vld [vmem:[#allocation2] sm:$0xff]
        %v2002 = vld [vmem:[#allocation2 + $0x8] sm:$0xff]
        %v2003 = vadd.f32 %v2001, %v1995
        %v2004 = vadd.f32 %v2002, %v1998
        %2005 = vst.msk [vmem:[#allocation2] sm:$0xff] %vm1840, %v2003
        %2006 = vst.msk [vmem:[#allocation2 + $0x8] sm:$0xff] %vm1840, %v2004
        %p2007 = scmp.eq.s32.totalorder %s25, 1
        // Predicated region
        $region102: #{transformer_lm.3} parent=92 // pred_check
          %p2008 = pneg %p2007
        $region103: #{transformer_lm.3} parent=92 // pred_check_branch
          %2010 = sbr.rel (%p2008) target = $region105
        $region104: #{transformer_lm.3} parent=92 // pred_region
          %v2011 = vld [vmem:[#allocation2] sm:$0xff]
          %v2012 = vld [vmem:[#allocation2 + $0x8] sm:$0xff]
          %v2013 = vpack.c.bf16 %v2011, %v2011
          %v2014 = vpack.c.bf16 %v2012, %v2012
          %vm2015 = vcmask 257024
          %2016 = vst.msk [vmem:[%s443] sm:$0xf] %vm2015, %v2013
          %2017 = vst.msk [vmem:[%s443 + $0x4] sm:$0xf] %vm2015, %v2014
        $region105: #{transformer_lm.3} parent=92 // pred_fallthru
          _
        %s2018 = smul.u32 2, %s24
        %p2019 = scmp.lt.s32.totalorder %s2018, 1
        %s2020 = scalar_select %p2019, %s2018, 1
        %s2021 = smul.addr %s2020, 4
        %s2022 = scalar_lea.vmem %s9, %s2021
        // Predicated region
        $region106: #{transformer_lm.3} parent=92 // pred_check
          %p2023 = pneg %p254
        $region107: #{transformer_lm.3} parent=92 // pred_check_branch
          %2025 = sbr.rel (%p2023) target = $region109
        $region108: #{transformer_lm.3} parent=92 // pred_region
          %s2026 = smul.u32 2, %s24
        $region109: #{transformer_lm.3} parent=92 // pred_fallthru
          _
        // Predicated region
        $region110: #{transformer_lm.3} parent=92 // pred_check
          %p2027 = pneg %p254
        $region111: #{transformer_lm.3} parent=92 // pred_check_branch
          %2029 = sbr.rel (%p2027) target = $region113
        $region112: #{transformer_lm.3} parent=92 // pred_region
          %s2030 = smul.u32 2, %s24
          %p2031 = scmp.lt.s32.totalorder %s2030, 1
          %s2032 = scalar_select %p2031, %s2030, 1
          %s2033 = smul.addr %s2032, 4
          %s2034 = scalar_lea.vmem %s9, %s2033
        $region113: #{transformer_lm.3} parent=92 // pred_fallthru
          _
      $region93: #{transformer_lm.3} parent=5 // pred_fallthru
        _
      %p2035 = scmp.le.s32.totalorder 2, %s15
      // Predicated region
      $region114: #{transformer_lm.3} parent=5 // pred_check
        %p2036 = pneg %p2035
      $region115: #{transformer_lm.3} parent=5 // pred_check_branch
        %2038 = sbr.rel (%p2036) target = $region117
      $region116: #{transformer_lm.3} parent=5 // pred_region
        %s2039 = ssub.s32 %s15, 2
      $region117: #{transformer_lm.3} parent=5 // pred_fallthru
        _
    $region6: #{transformer_lm.3} parent=1 // loop_footer
      %s19 = sadd.s32 1, %s15
    $region7: #{transformer_lm.3} parent=1 // loop_footer_branch
      %14 = sbr.rel target = $region3
    $region8: #{transformer_lm.3} parent=1 // loop_exit
      _

</llo_original>
